<compile_context>
chip_gen: v6e
topology: v6e:2x2x1
jax: 0.10.0
libtpu: 0.0.40
codegen_flags: <defaults>
</compile_context>

<pallas_src>
import jax
import jax.numpy as jnp
from jax.experimental import pallas as pl
from jax.experimental.pallas import tpu as pltpu

IN_DIM = 784
HID = 512
OUT_DIM = 10
OUT_PAD = 128          # lane-dense output block (10 -> 128)


def _round_up(n, m):
    return -(-n // m) * m


def mlp_kernel(x_ref, w1_ref, b1_ref, w2_ref, b2_ref, w3_ref, b3_ref, o_ref):
    # Whole forward pass on-chip: bf16 MXU matmuls with f32 accumulation,
    # bias-add / ReLU in f32 on the VPU. Activations never touch HBM.
    x = x_ref[...].astype(jnp.bfloat16)                                  # [bt, 784]
    h1 = jnp.dot(x, w1_ref[...], preferred_element_type=jnp.float32) + b1_ref[...]
    h1 = jnp.maximum(h1, 0.0).astype(jnp.bfloat16)                       # [bt, 512]
    h2 = jnp.dot(h1, w2_ref[...], preferred_element_type=jnp.float32) + b2_ref[...]
    h2 = jnp.maximum(h2, 0.0).astype(jnp.bfloat16)                       # [bt, 512]
    y = jnp.dot(h2, w3_ref[...], preferred_element_type=jnp.float32) + b3_ref[...]
    o_ref[...] = y.astype(o_ref.dtype)                                   # [bt, 128]


def prepare_params(w1, b1, w2, b2, w3, b3):
    """One-time parameter prep (pad + cast). Weights stored [in, out]."""
    bf = jnp.bfloat16
    w1_p = w1.astype(bf)                                                  # [784, 512]
    w2_p = w2.astype(bf)                                                  # [512, 512]
    w3_p = jnp.zeros((HID, OUT_PAD), bf).at[:, :OUT_DIM].set(w3.astype(bf))
    b1_p = b1.reshape(1, HID).astype(jnp.float32)
    b2_p = b2.reshape(1, HID).astype(jnp.float32)
    b3_p = jnp.zeros((1, OUT_PAD), jnp.float32).at[:, :OUT_DIM].set(
        b3.reshape(1, OUT_DIM).astype(jnp.float32))
    return w1_p, b1_p, w2_p, b2_p, w3_p, b3_p


def _pick_batch_tile(B, batch_tile):
    if B <= 8:
        return B                                   # single tiny tile, full-dim block is legal
    # At least 2 grid steps (v7x: 2 TensorCores), sublane-aligned, capped by batch_tile.
    return max(8, min(batch_tile, _round_up(pl.cdiv(B, 2), 8)))


def mnist_mlp_forward(x, prepared_params, *, batch_tile=512):
    """x: [B, 784] float; prepared_params from prepare_params(). Returns [B, 10] f32."""
    B = x.shape[0]
    w1_p, b1_p, w2_p, b2_p, w3_p, b3_p = prepared_params

    bt = _pick_batch_tile(B, batch_tile)
    grid = (pl.cdiv(B, bt),)                       # partial last block handled by Pallas

    resident = pl.Buffered(1)                      # constant index_map -> no double buffer

    out = pl.pallas_call(
        mlp_kernel,
        out_shape=jax.ShapeDtypeStruct((B, OUT_PAD), jnp.float32),
        grid_spec=pltpu.PrefetchScalarGridSpec(
            num_scalar_prefetch=0,
            grid=grid,
            in_specs=[
                pl.BlockSpec((bt, IN_DIM), lambda i: (i, 0)),                         # x tile
                pl.BlockSpec((IN_DIM, HID), lambda i: (0, 0), pipeline_mode=resident),  # w1
                pl.BlockSpec((1, HID), lambda i: (0, 0), pipeline_mode=resident),       # b1
                pl.BlockSpec((HID, HID), lambda i: (0, 0), pipeline_mode=resident),     # w2
                pl.BlockSpec((1, HID), lambda i: (0, 0), pipeline_mode=resident),       # b2
                pl.BlockSpec((HID, OUT_PAD), lambda i: (0, 0), pipeline_mode=resident), # w3
                pl.BlockSpec((1, OUT_PAD), lambda i: (0, 0), pipeline_mode=resident),   # b3
            ],
            out_specs=pl.BlockSpec((bt, OUT_PAD), lambda i: (i, 0)),
        ),
        compiler_params=pltpu.CompilerParams(
            dimension_semantics=("parallel",),     # batch tiles shard across TCs on v7x
        ),
    )(x.astype(jnp.float32), w1_p, b1_p, w2_p, b2_p, w3_p, b3_p)

    return out[:, :OUT_DIM]


def init_params(key):
    # PyTorch-like uniform(-1/sqrt(fan_in), 1/sqrt(fan_in)) init, weights stored [in, out].
    ks = jax.random.split(key, 6)

    def lin(kw, kb, fan_in, fan_out):
        bound = 1.0 / jnp.sqrt(jnp.float32(fan_in))
        w = jax.random.uniform(kw, (fan_in, fan_out), jnp.float32, -bound, bound)
        b = jax.random.uniform(kb, (fan_out,), jnp.float32, -bound, bound)
        return w, b

    w1, b1 = lin(ks[0], ks[1], IN_DIM, HID)
    w2, b2 = lin(ks[2], ks[3], HID, HID)
    w3, b3 = lin(ks[4], ks[5], HID, OUT_DIM)
    return w1, b1, w2, b2, w3, b3


def reference_forward_f32(x, w1, b1, w2, b2, w3, b3):
    h1 = jnp.maximum(x @ w1 + b1, 0.0)
    h2 = jnp.maximum(h1 @ w2 + b2, 0.0)
    return h2 @ w3 + b3


def reference_forward_bf16(x, w1, b1, w2, b2, w3, b3):
    # Same numerics as the kernel: bf16 operands, f32 accumulation, f32 bias/ReLU.
    f32 = jnp.float32
    bf = jnp.bfloat16
    h1 = jnp.maximum(jnp.dot(x.astype(bf), w1.astype(bf), preferred_element_type=f32) + b1, 0.0)
    h2 = jnp.maximum(jnp.dot(h1.astype(bf), w2.astype(bf), preferred_element_type=f32) + b2, 0.0)
    return jnp.dot(h2.astype(bf), w3.astype(bf), preferred_element_type=f32) + b3


if __name__ == "__main__":
    key = jax.random.PRNGKey(0)
    kx, kp = jax.random.split(key)

    # Non-multiple-of-tile batch: exercises the partial last block (bt=16 -> grid=(2,), 14-row tail).
    B = 30
    x = jax.random.normal(kx, (B, IN_DIM), dtype=jnp.float32)
    raw_params = init_params(kp)
    params = prepare_params(*raw_params)           # one-time prep, reused every forward

    out = mnist_mlp_forward(x, params)
    out = jax.block_until_ready(out)
    assert out.shape == (B, OUT_DIM)

    # Exact-path check (same bf16/f32-accumulate numerics as the kernel).
    ref_bf16 = reference_forward_bf16(x, *raw_params)
    assert jnp.allclose(out, ref_bf16, atol=2e-2, rtol=2e-2), "mismatch vs bf16-path reference"

    # Sanity check against the full-f32 PyTorch-equivalent forward (loose tol for bf16 operands).
    ref_f32 = reference_forward_f32(x, *raw_params)
    assert jnp.allclose(out, ref_f32, atol=8e-2, rtol=0.0), "mismatch vs f32 reference"

    print("KERNEL_OK")
</pallas_src>

<mosaic_0001>
module attributes {stable_mosaic.version = 11 : i64} {
  func.func @mlp_kernel(%arg0: i32, %arg1: memref<16x784xf32, #tpu.memory_space<vmem>>, %arg2: memref<784x512xbf16, #tpu.memory_space<vmem>>, %arg3: memref<1x512xf32, #tpu.memory_space<vmem>>, %arg4: memref<512x512xbf16, #tpu.memory_space<vmem>>, %arg5: memref<1x512xf32, #tpu.memory_space<vmem>>, %arg6: memref<512x128xbf16, #tpu.memory_space<vmem>>, %arg7: memref<1x128xf32, #tpu.memory_space<vmem>>, %arg8: memref<16x128xf32, #tpu.memory_space<vmem>>) attributes {dimension_semantics = [#tpu.dimension_semantics<parallel>], iteration_bounds = array<i64: 2>, scalar_prefetch = 0 : i64, scratch_operands = 0 : i64, tpu.core_type = #tpu.core_type<tc>, window_params = [{transform_indices = @transform_0, window_bounds = array<i64: 16, 784>}, {pipeline_mode = #tpu.pipeline_mode<synchronous>, transform_indices = @transform_1, window_bounds = array<i64: 784, 512>}, {pipeline_mode = #tpu.pipeline_mode<synchronous>, transform_indices = @transform_2, window_bounds = array<i64: 1, 512>}, {pipeline_mode = #tpu.pipeline_mode<synchronous>, transform_indices = @transform_3, window_bounds = array<i64: 512, 512>}, {pipeline_mode = #tpu.pipeline_mode<synchronous>, transform_indices = @transform_4, window_bounds = array<i64: 1, 512>}, {pipeline_mode = #tpu.pipeline_mode<synchronous>, transform_indices = @transform_5, window_bounds = array<i64: 512, 128>}, {pipeline_mode = #tpu.pipeline_mode<synchronous>, transform_indices = @transform_6, window_bounds = array<i64: 1, 128>}, {transform_indices = @transform_7, window_bounds = array<i64: 16, 128>}]} {
    %c0 = arith.constant 0 : index
    %c0_0 = arith.constant 0 : index
    %0 = vector.load %arg1[%c0, %c0_0] : memref<16x784xf32, #tpu.memory_space<vmem>>, vector<16x784xf32>
    %1 = arith.truncf %0 : vector<16x784xf32> to vector<16x784xbf16>
    %c0_1 = arith.constant 0 : index
    %c0_2 = arith.constant 0 : index
    %2 = vector.load %arg2[%c0_1, %c0_2] : memref<784x512xbf16, #tpu.memory_space<vmem>>, vector<784x512xbf16>
    %cst = arith.constant dense<0.000000e+00> : vector<16x512xf32>
    %3 = tpu.matmul %1, %2, %cst {dimension_numbers = #tpu.dot_dimension_numbers<[1], [0], [0], [1], [0, 0, 1, 1], [], []>} : vector<16x784xbf16>, vector<784x512xbf16>, vector<16x512xf32> -> vector<16x512xf32>
    %c0_3 = arith.constant 0 : index
    %c0_4 = arith.constant 0 : index
    %4 = vector.load %arg3[%c0_3, %c0_4] : memref<1x512xf32, #tpu.memory_space<vmem>>, vector<1x512xf32>
    %5 = vector.broadcast %4 : vector<1x512xf32> to vector<16x512xf32>
    %6 = arith.addf %3, %5 : vector<16x512xf32>
    %cst_5 = arith.constant 0.000000e+00 : f32
    %7 = vector.broadcast %cst_5 : f32 to vector<16x512xf32>
    %8 = arith.maximumf %6, %7 : vector<16x512xf32>
    %9 = arith.truncf %8 : vector<16x512xf32> to vector<16x512xbf16>
    %c0_6 = arith.constant 0 : index
    %c0_7 = arith.constant 0 : index
    %10 = vector.load %arg4[%c0_6, %c0_7] : memref<512x512xbf16, #tpu.memory_space<vmem>>, vector<512x512xbf16>
    %cst_8 = arith.constant dense<0.000000e+00> : vector<16x512xf32>
    %11 = tpu.matmul %9, %10, %cst_8 {dimension_numbers = #tpu.dot_dimension_numbers<[1], [0], [0], [1], [0, 0, 1, 1], [], []>} : vector<16x512xbf16>, vector<512x512xbf16>, vector<16x512xf32> -> vector<16x512xf32>
    %c0_9 = arith.constant 0 : index
    %c0_10 = arith.constant 0 : index
    %12 = vector.load %arg5[%c0_9, %c0_10] : memref<1x512xf32, #tpu.memory_space<vmem>>, vector<1x512xf32>
    %13 = vector.broadcast %12 : vector<1x512xf32> to vector<16x512xf32>
    %14 = arith.addf %11, %13 : vector<16x512xf32>
    %cst_11 = arith.constant 0.000000e+00 : f32
    %15 = vector.broadcast %cst_11 : f32 to vector<16x512xf32>
    %16 = arith.maximumf %14, %15 : vector<16x512xf32>
    %17 = arith.truncf %16 : vector<16x512xf32> to vector<16x512xbf16>
    %c0_12 = arith.constant 0 : index
    %c0_13 = arith.constant 0 : index
    %18 = vector.load %arg6[%c0_12, %c0_13] : memref<512x128xbf16, #tpu.memory_space<vmem>>, vector<512x128xbf16>
    %cst_14 = arith.constant dense<0.000000e+00> : vector<16x128xf32>
    %19 = tpu.matmul %17, %18, %cst_14 {dimension_numbers = #tpu.dot_dimension_numbers<[1], [0], [0], [1], [0, 0, 1, 1], [], []>} : vector<16x512xbf16>, vector<512x128xbf16>, vector<16x128xf32> -> vector<16x128xf32>
    %c0_15 = arith.constant 0 : index
    %c0_16 = arith.constant 0 : index
    %20 = vector.load %arg7[%c0_15, %c0_16] : memref<1x128xf32, #tpu.memory_space<vmem>>, vector<1x128xf32>
    %21 = vector.broadcast %20 : vector<1x128xf32> to vector<16x128xf32>
    %22 = arith.addf %19, %21 : vector<16x128xf32>
    %c0_17 = arith.constant 0 : index
    %c0_18 = arith.constant 0 : index
    %23 = vector.load %arg8[%c0_17, %c0_18] : memref<16x128xf32, #tpu.memory_space<vmem>>, vector<16x128xf32>
    tpu.vector_store %arg8[%c0_17, %c0_18], %22 {strides = array<i32>} : memref<16x128xf32, #tpu.memory_space<vmem>>, vector<16x128xf32>,
    return
  }
  func.func @transform_0(%arg0: i32) -> (i32, i32) {
    %c0_i32 = arith.constant 0 : i32
    %c0_i32_0 = arith.constant 0 : i32
    return %arg0, %c0_i32 : i32, i32
  }
  func.func @transform_1(%arg0: i32) -> (i32, i32) {
    %c0_i32 = arith.constant 0 : i32
    %c0_i32_0 = arith.constant 0 : i32
    %c0_i32_1 = arith.constant 0 : i32
    return %c0_i32, %c0_i32_0 : i32, i32
  }
  func.func @transform_2(%arg0: i32) -> (i32, i32) {
    %c0_i32 = arith.constant 0 : i32
    %c0_i32_0 = arith.constant 0 : i32
    %c0_i32_1 = arith.constant 0 : i32
    return %c0_i32, %c0_i32_0 : i32, i32
  }
  func.func @transform_3(%arg0: i32) -> (i32, i32) {
    %c0_i32 = arith.constant 0 : i32
    %c0_i32_0 = arith.constant 0 : i32
    %c0_i32_1 = arith.constant 0 : i32
    return %c0_i32, %c0_i32_0 : i32, i32
  }
  func.func @transform_4(%arg0: i32) -> (i32, i32) {
    %c0_i32 = arith.constant 0 : i32
    %c0_i32_0 = arith.constant 0 : i32
    %c0_i32_1 = arith.constant 0 : i32
    return %c0_i32, %c0_i32_0 : i32, i32
  }
  func.func @transform_5(%arg0: i32) -> (i32, i32) {
    %c0_i32 = arith.constant 0 : i32
    %c0_i32_0 = arith.constant 0 : i32
    %c0_i32_1 = arith.constant 0 : i32
    return %c0_i32, %c0_i32_0 : i32, i32
  }
  func.func @transform_6(%arg0: i32) -> (i32, i32) {
    %c0_i32 = arith.constant 0 : i32
    %c0_i32_0 = arith.constant 0 : i32
    %c0_i32_1 = arith.constant 0 : i32
    return %c0_i32, %c0_i32_0 : i32, i32
  }
  func.func @transform_7(%arg0: i32) -> (i32, i32) {
    %c0_i32 = arith.constant 0 : i32
    %c0_i32_0 = arith.constant 0 : i32
    return %arg0, %c0_i32 : i32, i32
  }
}

</mosaic_0001>

<llo_original>
// kernel: tpu_custom_call.1
$region0: #{tpu_custom_call.1}
  #allocation0 [shape = 'u32[]', space=smem, size = 0x4, offset = 0x4, fixed_abs, tag = 'smem constant byte address 0x4 - core index']
  #allocation1 [shape = 'u32[144,128]{1,0:T(1,128)}', space=vmem, size = 0x12000, scoped, tag = 'internal scratch']
  %s0 = inlined_call_operand.hbm [shape: f32[30,784], index: 0, kind: input, shape index: {}]
  %s1 = inlined_call_operand.hbm [shape: bf16[784,512], index: 1, kind: input, shape index: {}]
  %s2 = inlined_call_operand.hbm [shape: f32[1,512], index: 2, kind: input, shape index: {}]
  %s3 = inlined_call_operand.hbm [shape: bf16[512,512], index: 3, kind: input, shape index: {}]
  %s4 = inlined_call_operand.vmem [shape: f32[1,512], index: 4, kind: input, shape index: {}]
  %s5 = inlined_call_operand.hbm [shape: bf16[512,128], index: 5, kind: input, shape index: {}]
  %s6 = inlined_call_operand.vmem [shape: f32[1,128], index: 6, kind: input, shape index: {}]
  %s7 = inlined_call_operand.hbm [shape: f32[30,128], index: 7, kind: output, shape index: {}]
  %s8 = sld [smem:[#allocation0]]
  $region81: #{tpu_custom_call.1} parent=0
    _
  %s10 = ssub.s32 1, %s8
  %s11 = scalar_select 0, %s10, %s8
  $region1: #{tpu_custom_call.1} parent=0
    #allocation2 [shape = 'u8[114688]{0}', space=vmem, size = 0x1c000, scoped, tag = 'input window, operand 0']
    #allocation3 [shape = 's32[2]{0}', space=sflag, size = 0x8, scoped, tag = 'scoped memory for tpu_custom_call.1']
    #allocation4 [shape = 's32[2]{0}', space=sflag, size = 0x8, scoped, tag = 'scoped memory for tpu_custom_call.1']
    #allocation5 [shape = 'u8[802816]{0}', space=vmem, size = 0xc4000, scoped, tag = 'input window, operand 1, single buffered']
    #allocation6 [shape = 's32[1]{0}', space=sflag, size = 0x4, scoped, tag = 'scoped memory for tpu_custom_call.1']
    #allocation7 [shape = 'u8[2048]{0}', space=vmem, size = 0x800, scoped, tag = 'input window, operand 2, single buffered']
    #allocation8 [shape = 'u8[524288]{0}', space=vmem, size = 0x80000, scoped, tag = 'input window, operand 3, single buffered']
    #allocation9 [shape = 's32[1]{0}', space=sflag, size = 0x4, scoped, tag = 'scoped memory for tpu_custom_call.1']
    #allocation10 [shape = 'u8[131072]{0}', space=vmem, size = 0x20000, scoped, tag = 'input window, operand 5, single buffered']
    #allocation11 [shape = 'u8[16384]{0}', space=vmem, size = 0x4000, scoped, tag = 'output window, operand 0']
    %12 = vsyncpa [#allocation3], 0
    %s13 = scalar_lea.sflag [#allocation3], 1
    %14 = vsyncpa %s13, 0
    %15 = vsyncpa [#allocation6], 0
    %16 = vsyncpa [#allocation9], 0
    %17 = vsyncpa [#allocation4], 0
    %s18 = scalar_lea.sflag [#allocation4], 1
    %19 = vsyncpa %s18, 0
    loop: start=0, step=1, limit=4
    $region2: #{tpu_custom_call.1} parent=1 // loop_pre_header
      _
    $region3: #{tpu_custom_call.1} parent=1 // loop_header
      %s21 = sphi 0, %s25
      %p22 = scmp.ge.s32.totalorder %s21, 4
      %s31 = sphi 0, %s33
      %s34 = sphi 0, %s31
      %s35 = sphi 0, %s34
      %s51 = sphi 0, %s35
      %s55 = sphi 0, %s55
      %s57 = sphi 0, %s55
      %s58 = sphi 0, %s57
      %s72 = sphi 0, %s58
      %s76 = sphi 0, %s76
      %s78 = sphi 0, %s76
      %s79 = sphi 0, %s78
      %s93 = sphi 0, %s79
      %s97 = sphi 0, %s97
      %s99 = sphi 0, %s97
      %s100 = sphi 0, %s99
      %s114 = sphi 0, %s100
      %s118 = sphi 0, %s118
      %s120 = sphi 0, %s118
      %s121 = sphi 0, %s120
      %s135 = sphi 0, %s121
      %s139 = sphi 0, %s139
      %s141 = sphi 0, %s139
      %s142 = sphi 0, %s141
      %s156 = sphi 0, %s142
      %s160 = sphi 0, %s160
      %s162 = sphi 0, %s160
      %s163 = sphi 0, %s162
      %s177 = sphi 0, %s163
      %s183 = sphi 0, %s185
      %s186 = sphi 0, %s183
      %s187 = sphi 0, %s186
      %s203 = sphi 0, %s187
    $region4: #{tpu_custom_call.1} parent=1 // loop_header_branch
      %24 = sbr.rel (%p22) target = $region8
    $region5: #{tpu_custom_call.1} parent=1 // loop_body
      %s26 = ssub.s32 %s21, 1
      %s27 = ssub.s32 %s21, 2
      %s28 = sadd.s32 %s21, 1
      %s29 = ssub.s32 %s21, %s28
      %p30 = scmp.eq.s32.totalorder %s29, 0
      %s32 = sadd.s32 %s31, 1
      %s33 = scalar_select %p30, %s31, %s32
      %p36 = pneg %p30
      %p37 = scmp.eq.s32.totalorder %s21, 1
      %p38 = por %p36, %p37
      %p39 = scmp.ne.s32.totalorder %s31, %s34
      %p40 = scmp.eq.s32.totalorder %s21, 0
      %p41 = por %p39, %p40
      %p42 = scmp.ne.s32.totalorder %s31, %s34
      %p43 = scmp.eq.s32.totalorder %s26, 1
      %p44 = por %p42, %p43
      %p45 = scmp.ne.s32.totalorder %s34, %s35
      %p46 = scmp.eq.s32.totalorder %s26, 0
      %p47 = por %p45, %p46
      %p48 = scmp.ne.s32.totalorder %s34, %s35
      %p49 = scmp.eq.s32.totalorder %s27, 1
      %p50 = por %p48, %p49
      %p52 = scmp.ne.s32.totalorder %s35, %s51
      %p53 = scmp.eq.s32.totalorder %s27, 0
      %p54 = por %p52, %p53
      %s56 = sadd.s32 %s55, 1
      %p59 = scmp.eq.s32.totalorder %s21, 1
      %p60 = scmp.ne.s32.totalorder %s55, %s57
      %p61 = scmp.eq.s32.totalorder %s21, 0
      %p62 = por %p60, %p61
      %p63 = scmp.ne.s32.totalorder %s55, %s57
      %p64 = scmp.eq.s32.totalorder %s26, 1
      %p65 = por %p63, %p64
      %p66 = scmp.ne.s32.totalorder %s57, %s58
      %p67 = scmp.eq.s32.totalorder %s26, 0
      %p68 = por %p66, %p67
      %p69 = scmp.ne.s32.totalorder %s57, %s58
      %p70 = scmp.eq.s32.totalorder %s27, 1
      %p71 = por %p69, %p70
      %p73 = scmp.ne.s32.totalorder %s58, %s72
      %p74 = scmp.eq.s32.totalorder %s27, 0
      %p75 = por %p73, %p74
      %s77 = sadd.s32 %s76, 1
      %p80 = scmp.eq.s32.totalorder %s21, 1
      %p81 = scmp.ne.s32.totalorder %s76, %s78
      %p82 = scmp.eq.s32.totalorder %s21, 0
      %p83 = por %p81, %p82
      %p84 = scmp.ne.s32.totalorder %s76, %s78
      %p85 = scmp.eq.s32.totalorder %s26, 1
      %p86 = por %p84, %p85
      %p87 = scmp.ne.s32.totalorder %s78, %s79
      %p88 = scmp.eq.s32.totalorder %s26, 0
      %p89 = por %p87, %p88
      %p90 = scmp.ne.s32.totalorder %s78, %s79
      %p91 = scmp.eq.s32.totalorder %s27, 1
      %p92 = por %p90, %p91
      %p94 = scmp.ne.s32.totalorder %s79, %s93
      %p95 = scmp.eq.s32.totalorder %s27, 0
      %p96 = por %p94, %p95
      %s98 = sadd.s32 %s97, 1
      %p101 = scmp.eq.s32.totalorder %s21, 1
      %p102 = scmp.ne.s32.totalorder %s97, %s99
      %p103 = scmp.eq.s32.totalorder %s21, 0
      %p104 = por %p102, %p103
      %p105 = scmp.ne.s32.totalorder %s97, %s99
      %p106 = scmp.eq.s32.totalorder %s26, 1
      %p107 = por %p105, %p106
      %p108 = scmp.ne.s32.totalorder %s99, %s100
      %p109 = scmp.eq.s32.totalorder %s26, 0
      %p110 = por %p108, %p109
      %p111 = scmp.ne.s32.totalorder %s99, %s100
      %p112 = scmp.eq.s32.totalorder %s27, 1
      %p113 = por %p111, %p112
      %p115 = scmp.ne.s32.totalorder %s100, %s114
      %p116 = scmp.eq.s32.totalorder %s27, 0
      %p117 = por %p115, %p116
      %s119 = sadd.s32 %s118, 1
      %p122 = scmp.eq.s32.totalorder %s21, 1
      %p123 = scmp.ne.s32.totalorder %s118, %s120
      %p124 = scmp.eq.s32.totalorder %s21, 0
      %p125 = por %p123, %p124
      %p126 = scmp.ne.s32.totalorder %s118, %s120
      %p127 = scmp.eq.s32.totalorder %s26, 1
      %p128 = por %p126, %p127
      %p129 = scmp.ne.s32.totalorder %s120, %s121
      %p130 = scmp.eq.s32.totalorder %s26, 0
      %p131 = por %p129, %p130
      %p132 = scmp.ne.s32.totalorder %s120, %s121
      %p133 = scmp.eq.s32.totalorder %s27, 1
      %p134 = por %p132, %p133
      %p136 = scmp.ne.s32.totalorder %s121, %s135
      %p137 = scmp.eq.s32.totalorder %s27, 0
      %p138 = por %p136, %p137
      %s140 = sadd.s32 %s139, 1
      %p143 = scmp.eq.s32.totalorder %s21, 1
      %p144 = scmp.ne.s32.totalorder %s139, %s141
      %p145 = scmp.eq.s32.totalorder %s21, 0
      %p146 = por %p144, %p145
      %p147 = scmp.ne.s32.totalorder %s139, %s141
      %p148 = scmp.eq.s32.totalorder %s26, 1
      %p149 = por %p147, %p148
      %p150 = scmp.ne.s32.totalorder %s141, %s142
      %p151 = scmp.eq.s32.totalorder %s26, 0
      %p152 = por %p150, %p151
      %p153 = scmp.ne.s32.totalorder %s141, %s142
      %p154 = scmp.eq.s32.totalorder %s27, 1
      %p155 = por %p153, %p154
      %p157 = scmp.ne.s32.totalorder %s142, %s156
      %p158 = scmp.eq.s32.totalorder %s27, 0
      %p159 = por %p157, %p158
      %s161 = sadd.s32 %s160, 1
      %p164 = scmp.eq.s32.totalorder %s21, 1
      %p165 = scmp.ne.s32.totalorder %s160, %s162
      %p166 = scmp.eq.s32.totalorder %s21, 0
      %p167 = por %p165, %p166
      %p168 = scmp.ne.s32.totalorder %s160, %s162
      %p169 = scmp.eq.s32.totalorder %s26, 1
      %p170 = por %p168, %p169
      %p171 = scmp.ne.s32.totalorder %s162, %s163
      %p172 = scmp.eq.s32.totalorder %s26, 0
      %p173 = por %p171, %p172
      %p174 = scmp.ne.s32.totalorder %s162, %s163
      %p175 = scmp.eq.s32.totalorder %s27, 1
      %p176 = por %p174, %p175
      %p178 = scmp.ne.s32.totalorder %s163, %s177
      %p179 = scmp.eq.s32.totalorder %s27, 0
      %p180 = por %p178, %p179
      %s181 = ssub.s32 %s21, %s28
      %p182 = scmp.eq.s32.totalorder %s181, 0
      %s184 = sadd.s32 %s183, 1
      %s185 = scalar_select %p182, %s183, %s184
      %p188 = pneg %p182
      %p189 = scmp.eq.s32.totalorder %s21, 1
      %p190 = por %p188, %p189
      %p191 = scmp.ne.s32.totalorder %s183, %s186
      %p192 = scmp.eq.s32.totalorder %s21, 0
      %p193 = por %p191, %p192
      %p194 = scmp.ne.s32.totalorder %s183, %s186
      %p195 = scmp.eq.s32.totalorder %s26, 1
      %p196 = por %p194, %p195
      %p197 = scmp.ne.s32.totalorder %s186, %s187
      %p198 = scmp.eq.s32.totalorder %s26, 0
      %p199 = por %p197, %p198
      %p200 = scmp.ne.s32.totalorder %s186, %s187
      %p201 = scmp.eq.s32.totalorder %s27, 1
      %p202 = por %p200, %p201
      %p204 = scmp.ne.s32.totalorder %s187, %s203
      %p205 = scmp.eq.s32.totalorder %s27, 0
      %p206 = por %p204, %p205
      %p207 = scmp.le.s32.totalorder 1, %s21
      %p208 = scmp.lt.s32.totalorder %s21, 3
      %p209 = pnand %p207, %p208
      %p210 = pneg %p209
      // Predicated region
      $region9: #{tpu_custom_call.1} parent=5 // pred_check
        _
      $region10: #{tpu_custom_call.1} parent=5 // pred_check_branch
        %212 = sbr.rel (%p209) target = $region12
      $region11: #{tpu_custom_call.1} parent=5 // pred_region
        %s213 = ssub.s32 %s21, 1
        // Predicated region
        $region13: #{tpu_custom_call.1} parent=11 // pred_check
          %p214 = pneg %p68
        $region14: #{tpu_custom_call.1} parent=11 // pred_check_branch
          %216 = sbr.rel (%p214) target = $region16
        $region15: #{tpu_custom_call.1} parent=11 // pred_region
          %s218 = ssub.s32 25088, 25088
          %219 = vsyncadd [#allocation6], %s218
          %s220 = sshll.u32 [#allocation5], 4
          %s221 = int_to_ptr.vmem [resolvable:$true] %s220
          %226 = dma.hbm_to_vmem [thread:$0]  %s1, 25088, %s221, [#allocation6], 256, 256, 16
        $region16: #{tpu_custom_call.1} parent=11 // pred_fallthru
          _
        // Predicated region
        $region17: #{tpu_custom_call.1} parent=11 // pred_check
          %p227 = pneg %p89
        $region18: #{tpu_custom_call.1} parent=11 // pred_check_branch
          %229 = sbr.rel (%p227) target = $region20
        $region19: #{tpu_custom_call.1} parent=11 // pred_region
          %s231 = ssub.s32 64, 64
          %232 = vsyncadd [#allocation6], %s231
          %s234 = sshll.u32 [#allocation7], 4
          %s235 = int_to_ptr.vmem [resolvable:$true] %s234
          %237 = dma.hbm_to_vmem [thread:$0]  %s2, 64, %s235, [#allocation6]
        $region20: #{tpu_custom_call.1} parent=11 // pred_fallthru
          _
        // Predicated region
        $region21: #{tpu_custom_call.1} parent=11 // pred_check
          %p238 = pneg %p110
        $region22: #{tpu_custom_call.1} parent=11 // pred_check_branch
          %240 = sbr.rel (%p238) target = $region24
        $region23: #{tpu_custom_call.1} parent=11 // pred_region
          %s242 = ssub.s32 16384, 16384
          %243 = vsyncadd [#allocation9], %s242
          %s244 = sshll.u32 [#allocation8], 4
          %s245 = int_to_ptr.vmem [resolvable:$true] %s244
          %250 = dma.hbm_to_vmem [thread:$0]  %s3, 16384, %s245, [#allocation9], 256, 256, 16
        $region24: #{tpu_custom_call.1} parent=11 // pred_fallthru
          _
        // Predicated region
        $region25: #{tpu_custom_call.1} parent=11 // pred_check
          %p251 = pneg %p131
        $region26: #{tpu_custom_call.1} parent=11 // pred_check_branch
          %253 = sbr.rel (%p251) target = $region28
        $region27: #{tpu_custom_call.1} parent=11 // pred_region
          _
        $region28: #{tpu_custom_call.1} parent=11 // pred_fallthru
          _
        // Predicated region
        $region29: #{tpu_custom_call.1} parent=11 // pred_check
          %p254 = pneg %p152
        $region30: #{tpu_custom_call.1} parent=11 // pred_check_branch
          %256 = sbr.rel (%p254) target = $region32
        $region31: #{tpu_custom_call.1} parent=11 // pred_region
          %s258 = ssub.s32 4096, 4096
          %259 = vsyncadd [#allocation9], %s258
          %s260 = sshll.u32 [#allocation10], 4
          %s261 = int_to_ptr.vmem [resolvable:$true] %s260
          %266 = dma.hbm_to_vmem [thread:$0]  %s5, 4096, %s261, [#allocation9], 64, 64, 4
        $region32: #{tpu_custom_call.1} parent=11 // pred_fallthru
          _
        // Predicated region
        $region33: #{tpu_custom_call.1} parent=11 // pred_check
          %p267 = pneg %p173
        $region34: #{tpu_custom_call.1} parent=11 // pred_check_branch
          %269 = sbr.rel (%p267) target = $region36
        $region35: #{tpu_custom_call.1} parent=11 // pred_region
          _
        $region36: #{tpu_custom_call.1} parent=11 // pred_fallthru
          _
      $region12: #{tpu_custom_call.1} parent=5 // pred_fallthru
        _
      %p270 = scmp.lt.s32.totalorder %s21, 2
      // Predicated region
      $region37: #{tpu_custom_call.1} parent=5 // pred_check
        %p271 = pneg %p270
      $region38: #{tpu_custom_call.1} parent=5 // pred_check_branch
        %273 = sbr.rel (%p271) target = $region40
      $region39: #{tpu_custom_call.1} parent=5 // pred_region
        // Predicated region
        $region41: #{tpu_custom_call.1} parent=39 // pred_check
          %p274 = pneg %p41
        $region42: #{tpu_custom_call.1} parent=39 // pred_check_branch
          %276 = sbr.rel (%p274) target = $region44
        $region43: #{tpu_custom_call.1} parent=39 // pred_region
          %s277 = sand.u32 %s31, 1
          %s278 = scalar_lea.sflag [#allocation3], %s277
          %s279 = sand.u32 %s31, 1
          %s280 = smul.addr %s279, 112
          %s281 = scalar_lea.vmem [#allocation2], %s280
          %s282 = smul.u32 2, %s21
          %s284 = ssub.s32 1792, 1792
          %285 = vsyncadd %s278, %s284
          %s286 = smul.addr %s282, 7
          %s287 = smul.addr %s286, 128
          %s288 = scalar_lea.hbm %s0, %s287
          %s289 = sshll.u32 %s281, 4
          %s290 = int_to_ptr.vmem [resolvable:$true] %s289
          %295 = dma.hbm_to_vmem [thread:$0]  %s288, 1792, %s290, %s278, 896, 896, 56
        $region44: #{tpu_custom_call.1} parent=39 // pred_fallthru
          _
      $region40: #{tpu_custom_call.1} parent=5 // pred_fallthru
        _
      %p296 = scmp.le.s32.totalorder 1, %s21
      %p297 = scmp.lt.s32.totalorder %s21, 3
      %p298 = pnand %p296, %p297
      %p299 = pneg %p298
      // Predicated region
      $region45: #{tpu_custom_call.1} parent=5 // pred_check
        _
      $region46: #{tpu_custom_call.1} parent=5 // pred_check_branch
        %301 = sbr.rel (%p298) target = $region48
      $region47: #{tpu_custom_call.1} parent=5 // pred_region
        %s302 = ssub.s32 %s21, 1
        %s303 = sand.u32 %s34, 1
        %s304 = scalar_lea.sflag [#allocation3], %s303
        %s305 = sand.u32 %s34, 1
        %s306 = smul.addr %s305, 112
        %s307 = scalar_lea.vmem [#allocation2], %s306
        // Predicated region
        $region49: #{tpu_custom_call.1} parent=47 // pred_check
          %p308 = pneg %p47
        $region50: #{tpu_custom_call.1} parent=47 // pred_check_branch
          %310 = sbr.rel (%p308) target = $region52
        $region51: #{tpu_custom_call.1} parent=47 // pred_region
          %311 = dma.done %s304, 1792
        $region52: #{tpu_custom_call.1} parent=47 // pred_fallthru
          _
        // Predicated region
        $region53: #{tpu_custom_call.1} parent=47 // pred_check
          %p312 = pneg %p68
        $region54: #{tpu_custom_call.1} parent=47 // pred_check_branch
          %314 = sbr.rel (%p312) target = $region56
        $region55: #{tpu_custom_call.1} parent=47 // pred_region
          %315 = dma.done [#allocation6], 25088
        $region56: #{tpu_custom_call.1} parent=47 // pred_fallthru
          _
        // Predicated region
        $region57: #{tpu_custom_call.1} parent=47 // pred_check
          %p316 = pneg %p89
        $region58: #{tpu_custom_call.1} parent=47 // pred_check_branch
          %318 = sbr.rel (%p316) target = $region60
        $region59: #{tpu_custom_call.1} parent=47 // pred_region
          %319 = dma.done [#allocation6], 64
        $region60: #{tpu_custom_call.1} parent=47 // pred_fallthru
          _
        // Predicated region
        $region61: #{tpu_custom_call.1} parent=47 // pred_check
          %p320 = pneg %p110
        $region62: #{tpu_custom_call.1} parent=47 // pred_check_branch
          %322 = sbr.rel (%p320) target = $region64
        $region63: #{tpu_custom_call.1} parent=47 // pred_region
          %323 = dma.done [#allocation9], 16384
        $region64: #{tpu_custom_call.1} parent=47 // pred_fallthru
          _
        // Predicated region
        $region65: #{tpu_custom_call.1} parent=47 // pred_check
          %p324 = pneg %p152
        $region66: #{tpu_custom_call.1} parent=47 // pred_check_branch
          %326 = sbr.rel (%p324) target = $region68
        $region67: #{tpu_custom_call.1} parent=47 // pred_region
          %327 = dma.done [#allocation9], 4096
        $region68: #{tpu_custom_call.1} parent=47 // pred_fallthru
          _
        %s328 = sand.u32 %s34, 1
        %s329 = scalar_lea.sflag [#allocation3], %s328
        %s330 = sand.u32 %s34, 1
        %s331 = smul.addr %s330, 112
        %s332 = scalar_lea.vmem [#allocation2], %s331
        %p333 = pneg %p47
        %p334 = pneg %p44
        %p335 = pneg %p68
        %p336 = pneg %p65
        %p337 = pneg %p89
        %p338 = pneg %p86
        %p339 = pneg %p110
        %p340 = pneg %p107
        %p341 = pneg %p131
        %p342 = pneg %p128
        %p343 = pneg %p152
        %p344 = pneg %p149
        %p345 = pneg %p173
        %p346 = pneg %p170
        %p347 = pneg %p199
        %p348 = pneg %p196
        %s349 = sand.u32 %s186, 1
        %s350 = scalar_lea.sflag [#allocation4], %s349
        %s351 = sand.u32 %s186, 1
        %s352 = smul.addr %s351, 16
        %s353 = scalar_lea.vmem [#allocation11], %s352
        %s354 = smul.u32 2, %s26
        %s355 = smul.u32 2, %s26
        %v357 = vld [vmem:[%s307] sm:$0xff]
        %v358 = vld [vmem:[%s307 + $0x8] sm:$0xff]
        %v359 = vld [vmem:[%s307 + $0x10] sm:$0xff]
        %v360 = vld [vmem:[%s307 + $0x18] sm:$0xff]
        %v361 = vld [vmem:[%s307 + $0x20] sm:$0xff]
        %v362 = vld [vmem:[%s307 + $0x28] sm:$0xff]
        %v363 = vld [vmem:[%s307 + $0x30] sm:$0xff]
        %v364 = vld [vmem:[%s307 + $0x38] sm:$0xff]
        %v365 = vld [vmem:[%s307 + $0x40] sm:$0xff]
        %v366 = vld [vmem:[%s307 + $0x48] sm:$0xff]
        %v367 = vld [vmem:[%s307 + $0x50] sm:$0xff]
        %v368 = vld [vmem:[%s307 + $0x58] sm:$0xff]
        %v369 = vld [vmem:[%s307 + $0x60] sm:$0xff]
        %v370 = vld [vmem:[%s307 + $0x68] sm:$0xff]
        %v371 = vpack.c.bf16 %v364, %v357
        %v372 = vpack.c.bf16 %v365, %v358
        %v373 = vpack.c.bf16 %v366, %v359
        %v374 = vpack.c.bf16 %v367, %v360
        %v375 = vpack.c.bf16 %v368, %v361
        %v376 = vpack.c.bf16 %v369, %v362
        %v377 = vpack.c.bf16 %v370, %v363
        %v378 = vld [vmem:[#allocation5] sm:$0xff]
        %v379 = vld [vmem:[#allocation5 + $0x8] sm:$0xff]
        %v380 = vld [vmem:[#allocation5 + $0x10] sm:$0xff]
        %v381 = vld [vmem:[#allocation5 + $0x18] sm:$0xff]
        %v382 = vld [vmem:[#allocation5 + $0x20] sm:$0xff]
        %v383 = vld [vmem:[#allocation5 + $0x28] sm:$0xff]
        %v384 = vld [vmem:[#allocation5 + $0x30] sm:$0xff]
        %v385 = vld [vmem:[#allocation5 + $0x38] sm:$0xff]
        %v386 = vld [vmem:[#allocation5 + $0x40] sm:$0xff]
        %v387 = vld [vmem:[#allocation5 + $0x48] sm:$0xff]
        %v388 = vld [vmem:[#allocation5 + $0x50] sm:$0xff]
        %v389 = vld [vmem:[#allocation5 + $0x58] sm:$0xff]
        %v390 = vld [vmem:[#allocation5 + $0x60] sm:$0xff]
        %v391 = vld [vmem:[#allocation5 + $0x68] sm:$0xff]
        %v392 = vld [vmem:[#allocation5 + $0x70] sm:$0xff]
        %v393 = vld [vmem:[#allocation5 + $0x78] sm:$0xff]
        %v394 = vld [vmem:[#allocation5 + $0x80] sm:$0xff]
        %v395 = vld [vmem:[#allocation5 + $0x88] sm:$0xff]
        %v396 = vld [vmem:[#allocation5 + $0x90] sm:$0xff]
        %v397 = vld [vmem:[#allocation5 + $0x98] sm:$0xff]
        %v398 = vld [vmem:[#allocation5 + $0xa0] sm:$0xff]
        %v399 = vld [vmem:[#allocation5 + $0xa8] sm:$0xff]
        %v400 = vld [vmem:[#allocation5 + $0xb0] sm:$0xff]
        %v401 = vld [vmem:[#allocation5 + $0xb8] sm:$0xff]
        %v402 = vld [vmem:[#allocation5 + $0xc0] sm:$0xff]
        %v403 = vld [vmem:[#allocation5 + $0xc8] sm:$0xff]
        %v404 = vld [vmem:[#allocation5 + $0xd0] sm:$0xff]
        %v405 = vld [vmem:[#allocation5 + $0xd8] sm:$0xff]
        %v406 = vld [vmem:[#allocation5 + $0xe0] sm:$0xff]
        %v407 = vld [vmem:[#allocation5 + $0xe8] sm:$0xff]
        %v408 = vld [vmem:[#allocation5 + $0xf0] sm:$0xff]
        %v409 = vld [vmem:[#allocation5 + $0xf8] sm:$0xff]
        %v410 = vld [vmem:[#allocation5 + $0x100] sm:$0xff]
        %v411 = vld [vmem:[#allocation5 + $0x108] sm:$0xff]
        %v412 = vld [vmem:[#allocation5 + $0x110] sm:$0xff]
        %v413 = vld [vmem:[#allocation5 + $0x118] sm:$0xff]
        %v414 = vld [vmem:[#allocation5 + $0x120] sm:$0xff]
        %v415 = vld [vmem:[#allocation5 + $0x128] sm:$0xff]
        %v416 = vld [vmem:[#allocation5 + $0x130] sm:$0xff]
        %v417 = vld [vmem:[#allocation5 + $0x138] sm:$0xff]
        %v418 = vld [vmem:[#allocation5 + $0x140] sm:$0xff]
        %v419 = vld [vmem:[#allocation5 + $0x148] sm:$0xff]
        %v420 = vld [vmem:[#allocation5 + $0x150] sm:$0xff]
        %v421 = vld [vmem:[#allocation5 + $0x158] sm:$0xff]
        %v422 = vld [vmem:[#allocation5 + $0x160] sm:$0xff]
        %v423 = vld [vmem:[#allocation5 + $0x168] sm:$0xff]
        %v424 = vld [vmem:[#allocation5 + $0x170] sm:$0xff]
        %v425 = vld [vmem:[#allocation5 + $0x178] sm:$0xff]
        %v426 = vld [vmem:[#allocation5 + $0x180] sm:$0xff]
        %v427 = vld [vmem:[#allocation5 + $0x188] sm:$0xff]
        %v428 = vld [vmem:[#allocation5 + $0x190] sm:$0xff]
        %v429 = vld [vmem:[#allocation5 + $0x198] sm:$0xff]
        %v430 = vld [vmem:[#allocation5 + $0x1a0] sm:$0xff]
        %v431 = vld [vmem:[#allocation5 + $0x1a8] sm:$0xff]
        %v432 = vld [vmem:[#allocation5 + $0x1b0] sm:$0xff]
        %v433 = vld [vmem:[#allocation5 + $0x1b8] sm:$0xff]
        %v434 = vld [vmem:[#allocation5 + $0x1c0] sm:$0xff]
        %v435 = vld [vmem:[#allocation5 + $0x1c8] sm:$0xff]
        %v436 = vld [vmem:[#allocation5 + $0x1d0] sm:$0xff]
        %v437 = vld [vmem:[#allocation5 + $0x1d8] sm:$0xff]
        %v438 = vld [vmem:[#allocation5 + $0x1e0] sm:$0xff]
        %v439 = vld [vmem:[#allocation5 + $0x1e8] sm:$0xff]
        %v440 = vld [vmem:[#allocation5 + $0x1f0] sm:$0xff]
        %v441 = vld [vmem:[#allocation5 + $0x1f8] sm:$0xff]
        %v442 = vld [vmem:[#allocation5 + $0x200] sm:$0xff]
        %v443 = vld [vmem:[#allocation5 + $0x208] sm:$0xff]
        %v444 = vld [vmem:[#allocation5 + $0x210] sm:$0xff]
        %v445 = vld [vmem:[#allocation5 + $0x218] sm:$0xff]
        %v446 = vld [vmem:[#allocation5 + $0x220] sm:$0xff]
        %v447 = vld [vmem:[#allocation5 + $0x228] sm:$0xff]
        %v448 = vld [vmem:[#allocation5 + $0x230] sm:$0xff]
        %v449 = vld [vmem:[#allocation5 + $0x238] sm:$0xff]
        %v450 = vld [vmem:[#allocation5 + $0x240] sm:$0xff]
        %v451 = vld [vmem:[#allocation5 + $0x248] sm:$0xff]
        %v452 = vld [vmem:[#allocation5 + $0x250] sm:$0xff]
        %v453 = vld [vmem:[#allocation5 + $0x258] sm:$0xff]
        %v454 = vld [vmem:[#allocation5 + $0x260] sm:$0xff]
        %v455 = vld [vmem:[#allocation5 + $0x268] sm:$0xff]
        %v456 = vld [vmem:[#allocation5 + $0x270] sm:$0xff]
        %v457 = vld [vmem:[#allocation5 + $0x278] sm:$0xff]
        %v458 = vld [vmem:[#allocation5 + $0x280] sm:$0xff]
        %v459 = vld [vmem:[#allocation5 + $0x288] sm:$0xff]
        %v460 = vld [vmem:[#allocation5 + $0x290] sm:$0xff]
        %v461 = vld [vmem:[#allocation5 + $0x298] sm:$0xff]
        %v462 = vld [vmem:[#allocation5 + $0x2a0] sm:$0xff]
        %v463 = vld [vmem:[#allocation5 + $0x2a8] sm:$0xff]
        %v464 = vld [vmem:[#allocation5 + $0x2b0] sm:$0xff]
        %v465 = vld [vmem:[#allocation5 + $0x2b8] sm:$0xff]
        %v466 = vld [vmem:[#allocation5 + $0x2c0] sm:$0xff]
        %v467 = vld [vmem:[#allocation5 + $0x2c8] sm:$0xff]
        %v468 = vld [vmem:[#allocation5 + $0x2d0] sm:$0xff]
        %v469 = vld [vmem:[#allocation5 + $0x2d8] sm:$0xff]
        %v470 = vld [vmem:[#allocation5 + $0x2e0] sm:$0xff]
        %v471 = vld [vmem:[#allocation5 + $0x2e8] sm:$0xff]
        %v472 = vld [vmem:[#allocation5 + $0x2f0] sm:$0xff]
        %v473 = vld [vmem:[#allocation5 + $0x2f8] sm:$0xff]
        %v474 = vld [vmem:[#allocation5 + $0x300] sm:$0xff]
        %v475 = vld [vmem:[#allocation5 + $0x308] sm:$0xff]
        %v476 = vld [vmem:[#allocation5 + $0x310] sm:$0xff]
        %v477 = vld [vmem:[#allocation5 + $0x318] sm:$0xff]
        %v478 = vld [vmem:[#allocation5 + $0x320] sm:$0xff]
        %v479 = vld [vmem:[#allocation5 + $0x328] sm:$0xff]
        %v480 = vld [vmem:[#allocation5 + $0x330] sm:$0xff]
        %v481 = vld [vmem:[#allocation5 + $0x338] sm:$0xff]
        %v482 = vld [vmem:[#allocation5 + $0x340] sm:$0xff]
        %v483 = vld [vmem:[#allocation5 + $0x348] sm:$0xff]
        %v484 = vld [vmem:[#allocation5 + $0x350] sm:$0xff]
        %v485 = vld [vmem:[#allocation5 + $0x358] sm:$0xff]
        %v486 = vld [vmem:[#allocation5 + $0x360] sm:$0xff]
        %v487 = vld [vmem:[#allocation5 + $0x368] sm:$0xff]
        %v488 = vld [vmem:[#allocation5 + $0x370] sm:$0xff]
        %v489 = vld [vmem:[#allocation5 + $0x378] sm:$0xff]
        %v490 = vld [vmem:[#allocation5 + $0x380] sm:$0xff]
        %v491 = vld [vmem:[#allocation5 + $0x388] sm:$0xff]
        %v492 = vld [vmem:[#allocation5 + $0x390] sm:$0xff]
        %v493 = vld [vmem:[#allocation5 + $0x398] sm:$0xff]
        %v494 = vld [vmem:[#allocation5 + $0x3a0] sm:$0xff]
        %v495 = vld [vmem:[#allocation5 + $0x3a8] sm:$0xff]
        %v496 = vld [vmem:[#allocation5 + $0x3b0] sm:$0xff]
        %v497 = vld [vmem:[#allocation5 + $0x3b8] sm:$0xff]
        %v498 = vld [vmem:[#allocation5 + $0x3c0] sm:$0xff]
        %v499 = vld [vmem:[#allocation5 + $0x3c8] sm:$0xff]
        %v500 = vld [vmem:[#allocation5 + $0x3d0] sm:$0xff]
        %v501 = vld [vmem:[#allocation5 + $0x3d8] sm:$0xff]
        %v502 = vld [vmem:[#allocation5 + $0x3e0] sm:$0xff]
        %v503 = vld [vmem:[#allocation5 + $0x3e8] sm:$0xff]
        %v504 = vld [vmem:[#allocation5 + $0x3f0] sm:$0xff]
        %v505 = vld [vmem:[#allocation5 + $0x3f8] sm:$0xff]
        %v506 = vld [vmem:[#allocation5 + $0x400] sm:$0xff]
        %v507 = vld [vmem:[#allocation5 + $0x408] sm:$0xff]
        %v508 = vld [vmem:[#allocation5 + $0x410] sm:$0xff]
        %v509 = vld [vmem:[#allocation5 + $0x418] sm:$0xff]
        %v510 = vld [vmem:[#allocation5 + $0x420] sm:$0xff]
        %v511 = vld [vmem:[#allocation5 + $0x428] sm:$0xff]
        %v512 = vld [vmem:[#allocation5 + $0x430] sm:$0xff]
        %v513 = vld [vmem:[#allocation5 + $0x438] sm:$0xff]
        %v514 = vld [vmem:[#allocation5 + $0x440] sm:$0xff]
        %v515 = vld [vmem:[#allocation5 + $0x448] sm:$0xff]
        %v516 = vld [vmem:[#allocation5 + $0x450] sm:$0xff]
        %v517 = vld [vmem:[#allocation5 + $0x458] sm:$0xff]
        %v518 = vld [vmem:[#allocation5 + $0x460] sm:$0xff]
        %v519 = vld [vmem:[#allocation5 + $0x468] sm:$0xff]
        %v520 = vld [vmem:[#allocation5 + $0x470] sm:$0xff]
        %v521 = vld [vmem:[#allocation5 + $0x478] sm:$0xff]
        %v522 = vld [vmem:[#allocation5 + $0x480] sm:$0xff]
        %v523 = vld [vmem:[#allocation5 + $0x488] sm:$0xff]
        %v524 = vld [vmem:[#allocation5 + $0x490] sm:$0xff]
        %v525 = vld [vmem:[#allocation5 + $0x498] sm:$0xff]
        %v526 = vld [vmem:[#allocation5 + $0x4a0] sm:$0xff]
        %v527 = vld [vmem:[#allocation5 + $0x4a8] sm:$0xff]
        %v528 = vld [vmem:[#allocation5 + $0x4b0] sm:$0xff]
        %v529 = vld [vmem:[#allocation5 + $0x4b8] sm:$0xff]
        %v530 = vld [vmem:[#allocation5 + $0x4c0] sm:$0xff]
        %v531 = vld [vmem:[#allocation5 + $0x4c8] sm:$0xff]
        %v532 = vld [vmem:[#allocation5 + $0x4d0] sm:$0xff]
        %v533 = vld [vmem:[#allocation5 + $0x4d8] sm:$0xff]
        %v534 = vld [vmem:[#allocation5 + $0x4e0] sm:$0xff]
        %v535 = vld [vmem:[#allocation5 + $0x4e8] sm:$0xff]
        %v536 = vld [vmem:[#allocation5 + $0x4f0] sm:$0xff]
        %v537 = vld [vmem:[#allocation5 + $0x4f8] sm:$0xff]
        %v538 = vld [vmem:[#allocation5 + $0x500] sm:$0xff]
        %v539 = vld [vmem:[#allocation5 + $0x508] sm:$0xff]
        %v540 = vld [vmem:[#allocation5 + $0x510] sm:$0xff]
        %v541 = vld [vmem:[#allocation5 + $0x518] sm:$0xff]
        %v542 = vld [vmem:[#allocation5 + $0x520] sm:$0xff]
        %v543 = vld [vmem:[#allocation5 + $0x528] sm:$0xff]
        %v544 = vld [vmem:[#allocation5 + $0x530] sm:$0xff]
        %v545 = vld [vmem:[#allocation5 + $0x538] sm:$0xff]
        %v546 = vld [vmem:[#allocation5 + $0x540] sm:$0xff]
        %v547 = vld [vmem:[#allocation5 + $0x548] sm:$0xff]
        %v548 = vld [vmem:[#allocation5 + $0x550] sm:$0xff]
        %v549 = vld [vmem:[#allocation5 + $0x558] sm:$0xff]
        %v550 = vld [vmem:[#allocation5 + $0x560] sm:$0xff]
        %v551 = vld [vmem:[#allocation5 + $0x568] sm:$0xff]
        %v552 = vld [vmem:[#allocation5 + $0x570] sm:$0xff]
        %v553 = vld [vmem:[#allocation5 + $0x578] sm:$0xff]
        %v554 = vld [vmem:[#allocation5 + $0x580] sm:$0xff]
        %v555 = vld [vmem:[#allocation5 + $0x588] sm:$0xff]
        %v556 = vld [vmem:[#allocation5 + $0x590] sm:$0xff]
        %v557 = vld [vmem:[#allocation5 + $0x598] sm:$0xff]
        %v558 = vld [vmem:[#allocation5 + $0x5a0] sm:$0xff]
        %v559 = vld [vmem:[#allocation5 + $0x5a8] sm:$0xff]
        %v560 = vld [vmem:[#allocation5 + $0x5b0] sm:$0xff]
        %v561 = vld [vmem:[#allocation5 + $0x5b8] sm:$0xff]
        %v562 = vld [vmem:[#allocation5 + $0x5c0] sm:$0xff]
        %v563 = vld [vmem:[#allocation5 + $0x5c8] sm:$0xff]
        %v564 = vld [vmem:[#allocation5 + $0x5d0] sm:$0xff]
        %v565 = vld [vmem:[#allocation5 + $0x5d8] sm:$0xff]
        %v566 = vld [vmem:[#allocation5 + $0x5e0] sm:$0xff]
        %v567 = vld [vmem:[#allocation5 + $0x5e8] sm:$0xff]
        %v568 = vld [vmem:[#allocation5 + $0x5f0] sm:$0xff]
        %v569 = vld [vmem:[#allocation5 + $0x5f8] sm:$0xff]
        %v570 = vld [vmem:[#allocation5 + $0x600] sm:$0xff]
        %v571 = vld [vmem:[#allocation5 + $0x608] sm:$0xff]
        %v572 = vld [vmem:[#allocation5 + $0x610] sm:$0xff]
        %v573 = vld [vmem:[#allocation5 + $0x618] sm:$0xff]
        %v574 = vld [vmem:[#allocation7] sm:$0xf]
        %v576 = vlaneseq
        %v577 = vshrl.u32 %v576, 7
        %v578 = vsub.s32 0, %v577
        %v579 = vrot.slane %v574, %v578
        %v580 = vlaneseq
        %v581 = vshrl.u32 %v580, 7
        %v582 = vsub.s32 1, %v581
        %v583 = vrot.slane %v574, %v582
        %v584 = vlaneseq
        %v585 = vshrl.u32 %v584, 7
        %v586 = vsub.s32 2, %v585
        %v587 = vrot.slane %v574, %v586
        %v588 = vlaneseq
        %v589 = vshrl.u32 %v588, 7
        %v590 = vsub.s32 3, %v589
        %v591 = vrot.slane %v574, %v590
        %v792 = vunpack.c.l.b16 %v378
        %v793 = vunpack.c.h.b16 %v378
        %v794 = vunpack.c.l.b16 %v379
        %v795 = vunpack.c.h.b16 %v379
        %v796 = vunpack.c.l.b16 %v380
        %v797 = vunpack.c.h.b16 %v380
        %v798 = vunpack.c.l.b16 %v381
        %v799 = vunpack.c.h.b16 %v381
        %v800 = vunpack.c.l.b16 %v382
        %v801 = vunpack.c.h.b16 %v382
        %v802 = vunpack.c.l.b16 %v383
        %v803 = vunpack.c.h.b16 %v383
        %v804 = vunpack.c.l.b16 %v384
        %v805 = vunpack.c.h.b16 %v384
        %v806 = vunpack.c.l.b16 %v385
        %v807 = vunpack.c.h.b16 %v385
        %v808 = vunpack.c.l.b16 %v386
        %v809 = vunpack.c.h.b16 %v386
        %v810 = vunpack.c.l.b16 %v387
        %v811 = vunpack.c.h.b16 %v387
        %v812 = vunpack.c.l.b16 %v388
        %v813 = vunpack.c.h.b16 %v388
        %v814 = vunpack.c.l.b16 %v389
        %v815 = vunpack.c.h.b16 %v389
        %v816 = vunpack.c.l.b16 %v390
        %v817 = vunpack.c.h.b16 %v390
        %v818 = vunpack.c.l.b16 %v391
        %v819 = vunpack.c.h.b16 %v391
        %v820 = vunpack.c.l.b16 %v392
        %v821 = vunpack.c.h.b16 %v392
        %v822 = vunpack.c.l.b16 %v393
        %v823 = vunpack.c.h.b16 %v393
        %v824 = vunpack.c.l.b16 %v394
        %v825 = vunpack.c.h.b16 %v394
        %v826 = vunpack.c.l.b16 %v395
        %v827 = vunpack.c.h.b16 %v395
        %v828 = vunpack.c.l.b16 %v396
        %v829 = vunpack.c.h.b16 %v396
        %v830 = vunpack.c.l.b16 %v397
        %v831 = vunpack.c.h.b16 %v397
        %v832 = vunpack.c.l.b16 %v398
        %v833 = vunpack.c.h.b16 %v398
        %v834 = vunpack.c.l.b16 %v399
        %v835 = vunpack.c.h.b16 %v399
        %v836 = vunpack.c.l.b16 %v400
        %v837 = vunpack.c.h.b16 %v400
        %v838 = vunpack.c.l.b16 %v401
        %v839 = vunpack.c.h.b16 %v401
        %v840 = vunpack.c.l.b16 %v402
        %v841 = vunpack.c.h.b16 %v402
        %v842 = vunpack.c.l.b16 %v403
        %v843 = vunpack.c.h.b16 %v403
        %v844 = vunpack.c.l.b16 %v404
        %v845 = vunpack.c.h.b16 %v404
        %v846 = vunpack.c.l.b16 %v405
        %v847 = vunpack.c.h.b16 %v405
        %v848 = vunpack.c.l.b16 %v406
        %v849 = vunpack.c.h.b16 %v406
        %v850 = vunpack.c.l.b16 %v407
        %v851 = vunpack.c.h.b16 %v407
        %v852 = vunpack.c.l.b16 %v408
        %v853 = vunpack.c.h.b16 %v408
        %v854 = vunpack.c.l.b16 %v409
        %v855 = vunpack.c.h.b16 %v409
        %v856 = vunpack.c.l.b16 %v410
        %v857 = vunpack.c.h.b16 %v410
        %v858 = vunpack.c.l.b16 %v411
        %v859 = vunpack.c.h.b16 %v411
        %v860 = vunpack.c.l.b16 %v412
        %v861 = vunpack.c.h.b16 %v412
        %v862 = vunpack.c.l.b16 %v413
        %v863 = vunpack.c.h.b16 %v413
        %v864 = vunpack.c.l.b16 %v414
        %v865 = vunpack.c.h.b16 %v414
        %v866 = vunpack.c.l.b16 %v415
        %v867 = vunpack.c.h.b16 %v415
        %v868 = vunpack.c.l.b16 %v416
        %v869 = vunpack.c.h.b16 %v416
        %v870 = vunpack.c.l.b16 %v417
        %v871 = vunpack.c.h.b16 %v417
        %v872 = vunpack.c.l.b16 %v418
        %v873 = vunpack.c.h.b16 %v418
        %v874 = vunpack.c.l.b16 %v419
        %v875 = vunpack.c.h.b16 %v419
        %v876 = vunpack.c.l.b16 %v420
        %v877 = vunpack.c.h.b16 %v420
        %v878 = vunpack.c.l.b16 %v421
        %v879 = vunpack.c.h.b16 %v421
        %v880 = vunpack.c.l.b16 %v422
        %v881 = vunpack.c.h.b16 %v422
        %v882 = vunpack.c.l.b16 %v423
        %v883 = vunpack.c.h.b16 %v423
        %v884 = vunpack.c.l.b16 %v424
        %v885 = vunpack.c.h.b16 %v424
        %v886 = vunpack.c.l.b16 %v425
        %v887 = vunpack.c.h.b16 %v425
        %v888 = vunpack.c.l.b16 %v426
        %v889 = vunpack.c.h.b16 %v426
        %v890 = vunpack.c.l.b16 %v427
        %v891 = vunpack.c.h.b16 %v427
        %v892 = vunpack.c.l.b16 %v428
        %v893 = vunpack.c.h.b16 %v428
        %v894 = vunpack.c.l.b16 %v429
        %v895 = vunpack.c.h.b16 %v429
        %v896 = vunpack.c.l.b16 %v430
        %v897 = vunpack.c.h.b16 %v430
        %v898 = vunpack.c.l.b16 %v431
        %v899 = vunpack.c.h.b16 %v431
        %v900 = vunpack.c.l.b16 %v432
        %v901 = vunpack.c.h.b16 %v432
        %v902 = vunpack.c.l.b16 %v433
        %v903 = vunpack.c.h.b16 %v433
        %v904 = vunpack.c.l.b16 %v434
        %v905 = vunpack.c.h.b16 %v434
        %v906 = vunpack.c.l.b16 %v435
        %v907 = vunpack.c.h.b16 %v435
        %v908 = vunpack.c.l.b16 %v436
        %v909 = vunpack.c.h.b16 %v436
        %v910 = vunpack.c.l.b16 %v437
        %v911 = vunpack.c.h.b16 %v437
        %v912 = vunpack.c.l.b16 %v438
        %v913 = vunpack.c.h.b16 %v438
        %v914 = vunpack.c.l.b16 %v439
        %v915 = vunpack.c.h.b16 %v439
        %v916 = vunpack.c.l.b16 %v440
        %v917 = vunpack.c.h.b16 %v440
        %v918 = vunpack.c.l.b16 %v441
        %v919 = vunpack.c.h.b16 %v441
        %v920 = vunpack.c.l.b16 %v442
        %v921 = vunpack.c.h.b16 %v442
        %v922 = vunpack.c.l.b16 %v443
        %v923 = vunpack.c.h.b16 %v443
        %v924 = vunpack.c.l.b16 %v444
        %v925 = vunpack.c.h.b16 %v444
        %v926 = vunpack.c.l.b16 %v445
        %v927 = vunpack.c.h.b16 %v445
        %v928 = vunpack.c.l.b16 %v446
        %v929 = vunpack.c.h.b16 %v446
        %v930 = vunpack.c.l.b16 %v447
        %v931 = vunpack.c.h.b16 %v447
        %v932 = vunpack.c.l.b16 %v448
        %v933 = vunpack.c.h.b16 %v448
        %v934 = vunpack.c.l.b16 %v449
        %v935 = vunpack.c.h.b16 %v449
        %v936 = vunpack.c.l.b16 %v450
        %v937 = vunpack.c.h.b16 %v450
        %v938 = vunpack.c.l.b16 %v451
        %v939 = vunpack.c.h.b16 %v451
        %v940 = vunpack.c.l.b16 %v452
        %v941 = vunpack.c.h.b16 %v452
        %v942 = vunpack.c.l.b16 %v453
        %v943 = vunpack.c.h.b16 %v453
        %v944 = vunpack.c.l.b16 %v454
        %v945 = vunpack.c.h.b16 %v454
        %v946 = vunpack.c.l.b16 %v455
        %v947 = vunpack.c.h.b16 %v455
        %v948 = vunpack.c.l.b16 %v456
        %v949 = vunpack.c.h.b16 %v456
        %v950 = vunpack.c.l.b16 %v457
        %v951 = vunpack.c.h.b16 %v457
        %v952 = vunpack.c.l.b16 %v458
        %v953 = vunpack.c.h.b16 %v458
        %v954 = vunpack.c.l.b16 %v459
        %v955 = vunpack.c.h.b16 %v459
        %v956 = vunpack.c.l.b16 %v460
        %v957 = vunpack.c.h.b16 %v460
        %v958 = vunpack.c.l.b16 %v461
        %v959 = vunpack.c.h.b16 %v461
        %v960 = vunpack.c.l.b16 %v462
        %v961 = vunpack.c.h.b16 %v462
        %v962 = vunpack.c.l.b16 %v463
        %v963 = vunpack.c.h.b16 %v463
        %v964 = vunpack.c.l.b16 %v464
        %v965 = vunpack.c.h.b16 %v464
        %v966 = vunpack.c.l.b16 %v465
        %v967 = vunpack.c.h.b16 %v465
        %v968 = vunpack.c.l.b16 %v466
        %v969 = vunpack.c.h.b16 %v466
        %v970 = vunpack.c.l.b16 %v467
        %v971 = vunpack.c.h.b16 %v467
        %v972 = vunpack.c.l.b16 %v468
        %v973 = vunpack.c.h.b16 %v468
        %v974 = vunpack.c.l.b16 %v469
        %v975 = vunpack.c.h.b16 %v469
        %v976 = vunpack.c.l.b16 %v470
        %v977 = vunpack.c.h.b16 %v470
        %v978 = vunpack.c.l.b16 %v471
        %v979 = vunpack.c.h.b16 %v471
        %v980 = vunpack.c.l.b16 %v472
        %v981 = vunpack.c.h.b16 %v472
        %v982 = vunpack.c.l.b16 %v473
        %v983 = vunpack.c.h.b16 %v473
        %v984 = vunpack.c.l.b16 %v474
        %v985 = vunpack.c.h.b16 %v474
        %v986 = vunpack.c.l.b16 %v475
        %v987 = vunpack.c.h.b16 %v475
        %v988 = vunpack.c.l.b16 %v476
        %v989 = vunpack.c.h.b16 %v476
        %v990 = vunpack.c.l.b16 %v477
        %v991 = vunpack.c.h.b16 %v477
        %v992 = vunpack.c.l.b16 %v478
        %v993 = vunpack.c.h.b16 %v478
        %v994 = vunpack.c.l.b16 %v479
        %v995 = vunpack.c.h.b16 %v479
        %v996 = vunpack.c.l.b16 %v480
        %v997 = vunpack.c.h.b16 %v480
        %v998 = vunpack.c.l.b16 %v481
        %v999 = vunpack.c.h.b16 %v481
        %v1000 = vunpack.c.l.b16 %v482
        %v1001 = vunpack.c.h.b16 %v482
        %v1002 = vunpack.c.l.b16 %v483
        %v1003 = vunpack.c.h.b16 %v483
        %v1004 = vunpack.c.l.b16 %v484
        %v1005 = vunpack.c.h.b16 %v484
        %v1006 = vunpack.c.l.b16 %v485
        %v1007 = vunpack.c.h.b16 %v485
        %v1008 = vunpack.c.l.b16 %v486
        %v1009 = vunpack.c.h.b16 %v486
        %v1010 = vunpack.c.l.b16 %v487
        %v1011 = vunpack.c.h.b16 %v487
        %v1012 = vunpack.c.l.b16 %v488
        %v1013 = vunpack.c.h.b16 %v488
        %v1014 = vunpack.c.l.b16 %v489
        %v1015 = vunpack.c.h.b16 %v489
        %v1016 = vunpack.c.l.b16 %v490
        %v1017 = vunpack.c.h.b16 %v490
        %v1018 = vunpack.c.l.b16 %v491
        %v1019 = vunpack.c.h.b16 %v491
        %v1020 = vunpack.c.l.b16 %v492
        %v1021 = vunpack.c.h.b16 %v492
        %v1022 = vunpack.c.l.b16 %v493
        %v1023 = vunpack.c.h.b16 %v493
        %v1024 = vunpack.c.l.b16 %v494
        %v1025 = vunpack.c.h.b16 %v494
        %v1026 = vunpack.c.l.b16 %v495
        %v1027 = vunpack.c.h.b16 %v495
        %v1028 = vunpack.c.l.b16 %v496
        %v1029 = vunpack.c.h.b16 %v496
        %v1030 = vunpack.c.l.b16 %v497
        %v1031 = vunpack.c.h.b16 %v497
        %v1032 = vunpack.c.l.b16 %v498
        %v1033 = vunpack.c.h.b16 %v498
        %v1034 = vunpack.c.l.b16 %v499
        %v1035 = vunpack.c.h.b16 %v499
        %v1036 = vunpack.c.l.b16 %v500
        %v1037 = vunpack.c.h.b16 %v500
        %v1038 = vunpack.c.l.b16 %v501
        %v1039 = vunpack.c.h.b16 %v501
        %v1040 = vunpack.c.l.b16 %v502
        %v1041 = vunpack.c.h.b16 %v502
        %v1042 = vunpack.c.l.b16 %v503
        %v1043 = vunpack.c.h.b16 %v503
        %v1044 = vunpack.c.l.b16 %v504
        %v1045 = vunpack.c.h.b16 %v504
        %v1046 = vunpack.c.l.b16 %v505
        %v1047 = vunpack.c.h.b16 %v505
        %v1048 = vunpack.c.l.b16 %v506
        %v1049 = vunpack.c.h.b16 %v506
        %v1050 = vunpack.c.l.b16 %v507
        %v1051 = vunpack.c.h.b16 %v507
        %v1052 = vunpack.c.l.b16 %v508
        %v1053 = vunpack.c.h.b16 %v508
        %v1054 = vunpack.c.l.b16 %v509
        %v1055 = vunpack.c.h.b16 %v509
        %v1056 = vunpack.c.l.b16 %v510
        %v1057 = vunpack.c.h.b16 %v510
        %v1058 = vunpack.c.l.b16 %v511
        %v1059 = vunpack.c.h.b16 %v511
        %v1060 = vunpack.c.l.b16 %v512
        %v1061 = vunpack.c.h.b16 %v512
        %v1062 = vunpack.c.l.b16 %v513
        %v1063 = vunpack.c.h.b16 %v513
        %v1064 = vunpack.c.l.b16 %v514
        %v1065 = vunpack.c.h.b16 %v514
        %v1066 = vunpack.c.l.b16 %v515
        %v1067 = vunpack.c.h.b16 %v515
        %v1068 = vunpack.c.l.b16 %v516
        %v1069 = vunpack.c.h.b16 %v516
        %v1070 = vunpack.c.l.b16 %v517
        %v1071 = vunpack.c.h.b16 %v517
        %v1072 = vunpack.c.l.b16 %v518
        %v1073 = vunpack.c.h.b16 %v518
        %v1074 = vunpack.c.l.b16 %v519
        %v1075 = vunpack.c.h.b16 %v519
        %v1076 = vunpack.c.l.b16 %v520
        %v1077 = vunpack.c.h.b16 %v520
        %v1078 = vunpack.c.l.b16 %v521
        %v1079 = vunpack.c.h.b16 %v521
        %v1080 = vunpack.c.l.b16 %v522
        %v1081 = vunpack.c.h.b16 %v522
        %v1082 = vunpack.c.l.b16 %v523
        %v1083 = vunpack.c.h.b16 %v523
        %v1084 = vunpack.c.l.b16 %v524
        %v1085 = vunpack.c.h.b16 %v524
        %v1086 = vunpack.c.l.b16 %v525
        %v1087 = vunpack.c.h.b16 %v525
        %v1088 = vunpack.c.l.b16 %v526
        %v1089 = vunpack.c.h.b16 %v526
        %v1090 = vunpack.c.l.b16 %v527
        %v1091 = vunpack.c.h.b16 %v527
        %v1092 = vunpack.c.l.b16 %v528
        %v1093 = vunpack.c.h.b16 %v528
        %v1094 = vunpack.c.l.b16 %v529
        %v1095 = vunpack.c.h.b16 %v529
        %v1096 = vunpack.c.l.b16 %v530
        %v1097 = vunpack.c.h.b16 %v530
        %v1098 = vunpack.c.l.b16 %v531
        %v1099 = vunpack.c.h.b16 %v531
        %v1100 = vunpack.c.l.b16 %v532
        %v1101 = vunpack.c.h.b16 %v532
        %v1102 = vunpack.c.l.b16 %v533
        %v1103 = vunpack.c.h.b16 %v533
        %v1104 = vunpack.c.l.b16 %v534
        %v1105 = vunpack.c.h.b16 %v534
        %v1106 = vunpack.c.l.b16 %v535
        %v1107 = vunpack.c.h.b16 %v535
        %v1108 = vunpack.c.l.b16 %v536
        %v1109 = vunpack.c.h.b16 %v536
        %v1110 = vunpack.c.l.b16 %v537
        %v1111 = vunpack.c.h.b16 %v537
        %v1112 = vunpack.c.l.b16 %v538
        %v1113 = vunpack.c.h.b16 %v538
        %v1114 = vunpack.c.l.b16 %v539
        %v1115 = vunpack.c.h.b16 %v539
        %v1116 = vunpack.c.l.b16 %v540
        %v1117 = vunpack.c.h.b16 %v540
        %v1118 = vunpack.c.l.b16 %v541
        %v1119 = vunpack.c.h.b16 %v541
        %v1120 = vunpack.c.l.b16 %v542
        %v1121 = vunpack.c.h.b16 %v542
        %v1122 = vunpack.c.l.b16 %v543
        %v1123 = vunpack.c.h.b16 %v543
        %v1124 = vunpack.c.l.b16 %v544
        %v1125 = vunpack.c.h.b16 %v544
        %v1126 = vunpack.c.l.b16 %v545
        %v1127 = vunpack.c.h.b16 %v545
        %v1128 = vunpack.c.l.b16 %v546
        %v1129 = vunpack.c.h.b16 %v546
        %v1130 = vunpack.c.l.b16 %v547
        %v1131 = vunpack.c.h.b16 %v547
        %v1132 = vunpack.c.l.b16 %v548
        %v1133 = vunpack.c.h.b16 %v548
        %v1134 = vunpack.c.l.b16 %v549
        %v1135 = vunpack.c.h.b16 %v549
        %v1136 = vunpack.c.l.b16 %v550
        %v1137 = vunpack.c.h.b16 %v550
        %v1138 = vunpack.c.l.b16 %v551
        %v1139 = vunpack.c.h.b16 %v551
        %v1140 = vunpack.c.l.b16 %v552
        %v1141 = vunpack.c.h.b16 %v552
        %v1142 = vunpack.c.l.b16 %v553
        %v1143 = vunpack.c.h.b16 %v553
        %v1144 = vunpack.c.l.b16 %v554
        %v1145 = vunpack.c.h.b16 %v554
        %v1146 = vunpack.c.l.b16 %v555
        %v1147 = vunpack.c.h.b16 %v555
        %v1148 = vunpack.c.l.b16 %v556
        %v1149 = vunpack.c.h.b16 %v556
        %v1150 = vunpack.c.l.b16 %v557
        %v1151 = vunpack.c.h.b16 %v557
        %v1152 = vunpack.c.l.b16 %v558
        %v1153 = vunpack.c.h.b16 %v558
        %v1154 = vunpack.c.l.b16 %v559
        %v1155 = vunpack.c.h.b16 %v559
        %v1156 = vunpack.c.l.b16 %v560
        %v1157 = vunpack.c.h.b16 %v560
        %v1158 = vunpack.c.l.b16 %v561
        %v1159 = vunpack.c.h.b16 %v561
        %v1160 = vunpack.c.l.b16 %v562
        %v1161 = vunpack.c.h.b16 %v562
        %v1162 = vunpack.c.l.b16 %v563
        %v1163 = vunpack.c.h.b16 %v563
        %v1164 = vunpack.c.l.b16 %v564
        %v1165 = vunpack.c.h.b16 %v564
        %v1166 = vunpack.c.l.b16 %v565
        %v1167 = vunpack.c.h.b16 %v565
        %v1168 = vunpack.c.l.b16 %v566
        %v1169 = vunpack.c.h.b16 %v566
        %v1170 = vunpack.c.l.b16 %v567
        %v1171 = vunpack.c.h.b16 %v567
        %v1172 = vunpack.c.l.b16 %v568
        %v1173 = vunpack.c.h.b16 %v568
        %v1174 = vunpack.c.l.b16 %v569
        %v1175 = vunpack.c.h.b16 %v569
        %v1176 = vunpack.c.l.b16 %v570
        %v1177 = vunpack.c.h.b16 %v570
        %v1178 = vunpack.c.l.b16 %v571
        %v1179 = vunpack.c.h.b16 %v571
        %v1180 = vunpack.c.l.b16 %v572
        %v1181 = vunpack.c.h.b16 %v572
        %v1182 = vunpack.c.l.b16 %v573
        %v1183 = vunpack.c.h.b16 %v573
        %v1184 = vpack.c.b16 %v796, %v792
        %v1185 = vpack.c.b16 %v797, %v793
        %v1186 = vpack.c.b16 %v798, %v794
        %v1187 = vpack.c.b16 %v799, %v795
        %v1188 = vpack.c.b16 %v804, %v800
        %v1189 = vpack.c.b16 %v805, %v801
        %v1190 = vpack.c.b16 %v806, %v802
        %v1191 = vpack.c.b16 %v807, %v803
        %v1192 = vpack.c.b16 %v812, %v808
        %v1193 = vpack.c.b16 %v813, %v809
        %v1194 = vpack.c.b16 %v814, %v810
        %v1195 = vpack.c.b16 %v815, %v811
        %v1196 = vpack.c.b16 %v820, %v816
        %v1197 = vpack.c.b16 %v821, %v817
        %v1198 = vpack.c.b16 %v822, %v818
        %v1199 = vpack.c.b16 %v823, %v819
        %v1200 = vpack.c.b16 %v828, %v824
        %v1201 = vpack.c.b16 %v829, %v825
        %v1202 = vpack.c.b16 %v830, %v826
        %v1203 = vpack.c.b16 %v831, %v827
        %v1204 = vpack.c.b16 %v836, %v832
        %v1205 = vpack.c.b16 %v837, %v833
        %v1206 = vpack.c.b16 %v838, %v834
        %v1207 = vpack.c.b16 %v839, %v835
        %v1208 = vpack.c.b16 %v844, %v840
        %v1209 = vpack.c.b16 %v845, %v841
        %v1210 = vpack.c.b16 %v846, %v842
        %v1211 = vpack.c.b16 %v847, %v843
        %v1212 = vpack.c.b16 %v852, %v848
        %v1213 = vpack.c.b16 %v853, %v849
        %v1214 = vpack.c.b16 %v854, %v850
        %v1215 = vpack.c.b16 %v855, %v851
        %v1216 = vpack.c.b16 %v860, %v856
        %v1217 = vpack.c.b16 %v861, %v857
        %v1218 = vpack.c.b16 %v862, %v858
        %v1219 = vpack.c.b16 %v863, %v859
        %v1220 = vpack.c.b16 %v868, %v864
        %v1221 = vpack.c.b16 %v869, %v865
        %v1222 = vpack.c.b16 %v870, %v866
        %v1223 = vpack.c.b16 %v871, %v867
        %v1224 = vpack.c.b16 %v876, %v872
        %v1225 = vpack.c.b16 %v877, %v873
        %v1226 = vpack.c.b16 %v878, %v874
        %v1227 = vpack.c.b16 %v879, %v875
        %v1228 = vpack.c.b16 %v884, %v880
        %v1229 = vpack.c.b16 %v885, %v881
        %v1230 = vpack.c.b16 %v886, %v882
        %v1231 = vpack.c.b16 %v887, %v883
        %v1232 = vpack.c.b16 %v892, %v888
        %v1233 = vpack.c.b16 %v893, %v889
        %v1234 = vpack.c.b16 %v894, %v890
        %v1235 = vpack.c.b16 %v895, %v891
        %v1236 = vpack.c.b16 %v900, %v896
        %v1237 = vpack.c.b16 %v901, %v897
        %v1238 = vpack.c.b16 %v902, %v898
        %v1239 = vpack.c.b16 %v903, %v899
        %v1240 = vpack.c.b16 %v908, %v904
        %v1241 = vpack.c.b16 %v909, %v905
        %v1242 = vpack.c.b16 %v910, %v906
        %v1243 = vpack.c.b16 %v911, %v907
        %v1244 = vpack.c.b16 %v916, %v912
        %v1245 = vpack.c.b16 %v917, %v913
        %v1246 = vpack.c.b16 %v918, %v914
        %v1247 = vpack.c.b16 %v919, %v915
        %v1248 = vpack.c.b16 %v924, %v920
        %v1249 = vpack.c.b16 %v925, %v921
        %v1250 = vpack.c.b16 %v926, %v922
        %v1251 = vpack.c.b16 %v927, %v923
        %v1252 = vpack.c.b16 %v932, %v928
        %v1253 = vpack.c.b16 %v933, %v929
        %v1254 = vpack.c.b16 %v934, %v930
        %v1255 = vpack.c.b16 %v935, %v931
        %v1256 = vpack.c.b16 %v940, %v936
        %v1257 = vpack.c.b16 %v941, %v937
        %v1258 = vpack.c.b16 %v942, %v938
        %v1259 = vpack.c.b16 %v943, %v939
        %v1260 = vpack.c.b16 %v948, %v944
        %v1261 = vpack.c.b16 %v949, %v945
        %v1262 = vpack.c.b16 %v950, %v946
        %v1263 = vpack.c.b16 %v951, %v947
        %v1264 = vpack.c.b16 %v956, %v952
        %v1265 = vpack.c.b16 %v957, %v953
        %v1266 = vpack.c.b16 %v958, %v954
        %v1267 = vpack.c.b16 %v959, %v955
        %v1268 = vpack.c.b16 %v964, %v960
        %v1269 = vpack.c.b16 %v965, %v961
        %v1270 = vpack.c.b16 %v966, %v962
        %v1271 = vpack.c.b16 %v967, %v963
        %v1272 = vpack.c.b16 %v972, %v968
        %v1273 = vpack.c.b16 %v973, %v969
        %v1274 = vpack.c.b16 %v974, %v970
        %v1275 = vpack.c.b16 %v975, %v971
        %v1276 = vpack.c.b16 %v980, %v976
        %v1277 = vpack.c.b16 %v981, %v977
        %v1278 = vpack.c.b16 %v982, %v978
        %v1279 = vpack.c.b16 %v983, %v979
        %v1280 = vpack.c.b16 %v988, %v984
        %v1281 = vpack.c.b16 %v989, %v985
        %v1282 = vpack.c.b16 %v990, %v986
        %v1283 = vpack.c.b16 %v991, %v987
        %v1284 = vpack.c.b16 %v996, %v992
        %v1285 = vpack.c.b16 %v997, %v993
        %v1286 = vpack.c.b16 %v998, %v994
        %v1287 = vpack.c.b16 %v999, %v995
        %v1288 = vpack.c.b16 %v1004, %v1000
        %v1289 = vpack.c.b16 %v1005, %v1001
        %v1290 = vpack.c.b16 %v1006, %v1002
        %v1291 = vpack.c.b16 %v1007, %v1003
        %v1292 = vpack.c.b16 %v1012, %v1008
        %v1293 = vpack.c.b16 %v1013, %v1009
        %v1294 = vpack.c.b16 %v1014, %v1010
        %v1295 = vpack.c.b16 %v1015, %v1011
        %v1296 = vpack.c.b16 %v1020, %v1016
        %v1297 = vpack.c.b16 %v1021, %v1017
        %v1298 = vpack.c.b16 %v1022, %v1018
        %v1299 = vpack.c.b16 %v1023, %v1019
        %v1300 = vpack.c.b16 %v1028, %v1024
        %v1301 = vpack.c.b16 %v1029, %v1025
        %v1302 = vpack.c.b16 %v1030, %v1026
        %v1303 = vpack.c.b16 %v1031, %v1027
        %v1304 = vpack.c.b16 %v1036, %v1032
        %v1305 = vpack.c.b16 %v1037, %v1033
        %v1306 = vpack.c.b16 %v1038, %v1034
        %v1307 = vpack.c.b16 %v1039, %v1035
        %v1308 = vpack.c.b16 %v1044, %v1040
        %v1309 = vpack.c.b16 %v1045, %v1041
        %v1310 = vpack.c.b16 %v1046, %v1042
        %v1311 = vpack.c.b16 %v1047, %v1043
        %v1312 = vpack.c.b16 %v1052, %v1048
        %v1313 = vpack.c.b16 %v1053, %v1049
        %v1314 = vpack.c.b16 %v1054, %v1050
        %v1315 = vpack.c.b16 %v1055, %v1051
        %v1316 = vpack.c.b16 %v1060, %v1056
        %v1317 = vpack.c.b16 %v1061, %v1057
        %v1318 = vpack.c.b16 %v1062, %v1058
        %v1319 = vpack.c.b16 %v1063, %v1059
        %v1320 = vpack.c.b16 %v1068, %v1064
        %v1321 = vpack.c.b16 %v1069, %v1065
        %v1322 = vpack.c.b16 %v1070, %v1066
        %v1323 = vpack.c.b16 %v1071, %v1067
        %v1324 = vpack.c.b16 %v1076, %v1072
        %v1325 = vpack.c.b16 %v1077, %v1073
        %v1326 = vpack.c.b16 %v1078, %v1074
        %v1327 = vpack.c.b16 %v1079, %v1075
        %v1328 = vpack.c.b16 %v1084, %v1080
        %v1329 = vpack.c.b16 %v1085, %v1081
        %v1330 = vpack.c.b16 %v1086, %v1082
        %v1331 = vpack.c.b16 %v1087, %v1083
        %v1332 = vpack.c.b16 %v1092, %v1088
        %v1333 = vpack.c.b16 %v1093, %v1089
        %v1334 = vpack.c.b16 %v1094, %v1090
        %v1335 = vpack.c.b16 %v1095, %v1091
        %v1336 = vpack.c.b16 %v1100, %v1096
        %v1337 = vpack.c.b16 %v1101, %v1097
        %v1338 = vpack.c.b16 %v1102, %v1098
        %v1339 = vpack.c.b16 %v1103, %v1099
        %v1340 = vpack.c.b16 %v1108, %v1104
        %v1341 = vpack.c.b16 %v1109, %v1105
        %v1342 = vpack.c.b16 %v1110, %v1106
        %v1343 = vpack.c.b16 %v1111, %v1107
        %v1344 = vpack.c.b16 %v1116, %v1112
        %v1345 = vpack.c.b16 %v1117, %v1113
        %v1346 = vpack.c.b16 %v1118, %v1114
        %v1347 = vpack.c.b16 %v1119, %v1115
        %v1348 = vpack.c.b16 %v1124, %v1120
        %v1349 = vpack.c.b16 %v1125, %v1121
        %v1350 = vpack.c.b16 %v1126, %v1122
        %v1351 = vpack.c.b16 %v1127, %v1123
        %v1352 = vpack.c.b16 %v1132, %v1128
        %v1353 = vpack.c.b16 %v1133, %v1129
        %v1354 = vpack.c.b16 %v1134, %v1130
        %v1355 = vpack.c.b16 %v1135, %v1131
        %v1356 = vpack.c.b16 %v1140, %v1136
        %v1357 = vpack.c.b16 %v1141, %v1137
        %v1358 = vpack.c.b16 %v1142, %v1138
        %v1359 = vpack.c.b16 %v1143, %v1139
        %v1360 = vpack.c.b16 %v1148, %v1144
        %v1361 = vpack.c.b16 %v1149, %v1145
        %v1362 = vpack.c.b16 %v1150, %v1146
        %v1363 = vpack.c.b16 %v1151, %v1147
        %v1364 = vpack.c.b16 %v1156, %v1152
        %v1365 = vpack.c.b16 %v1157, %v1153
        %v1366 = vpack.c.b16 %v1158, %v1154
        %v1367 = vpack.c.b16 %v1159, %v1155
        %v1368 = vpack.c.b16 %v1164, %v1160
        %v1369 = vpack.c.b16 %v1165, %v1161
        %v1370 = vpack.c.b16 %v1166, %v1162
        %v1371 = vpack.c.b16 %v1167, %v1163
        %v1372 = vpack.c.b16 %v1172, %v1168
        %v1373 = vpack.c.b16 %v1173, %v1169
        %v1374 = vpack.c.b16 %v1174, %v1170
        %v1375 = vpack.c.b16 %v1175, %v1171
        %v1376 = vpack.c.b16 %v1180, %v1176
        %v1377 = vpack.c.b16 %v1181, %v1177
        %v1378 = vpack.c.b16 %v1182, %v1178
        %v1379 = vpack.c.b16 %v1183, %v1179
        %vm1576 = vcmask 130048
        %v1578 = vsel %vm1576, %v377, 0
        %1580 = vmatprep.subr.bf16.mxu0 %v1213
        %1581 = vmatpush1.bf16.msra.mxu0 %v1212
        %1582 = vmatprep.subr.bf16.mxu0 %v1209
        %1583 = vmatpush1.bf16.msra.mxu0 %v1208
        %1584 = vmatprep.subr.bf16.mxu0 %v1205
        %1585 = vmatpush1.bf16.msra.mxu0 %v1204
        %1586 = vmatprep.subr.bf16.mxu0 %v1201
        %1587 = vmatpush1.bf16.msra.mxu0 %v1200
        %1588 = vmatprep.subr.bf16.mxu0 %v1197
        %1589 = vmatpush1.bf16.msra.mxu0 %v1196
        %1590 = vmatprep.subr.bf16.mxu0 %v1193
        %1591 = vmatpush1.bf16.msra.mxu0 %v1192
        %1592 = vmatprep.subr.bf16.mxu0 %v1189
        %1593 = vmatpush1.bf16.msra.mxu0 %v1188
        %1594 = vmatprep.subr.bf16.mxu0 %v1185
        %1595 = vmatpush1.bf16.msra.mxu0 %v1184
        %1596 = vmatprep.subr.bf16.mxu0 %v1245
        %1597 = vmatpush2.bf16.msra.mxu0 %v1244
        %1598 = vmatprep.subr.bf16.mxu0 %v1241
        %1599 = vmatpush2.bf16.msra.mxu0 %v1240
        %1600 = vmatprep.subr.bf16.mxu0 %v1237
        %1601 = vmatpush2.bf16.msra.mxu0 %v1236
        %1602 = vmatprep.subr.bf16.mxu0 %v1233
        %1603 = vmatpush2.bf16.msra.mxu0 %v1232
        %1604 = vmatprep.subr.bf16.mxu0 %v1229
        %1605 = vmatpush2.bf16.msra.mxu0 %v1228
        %1606 = vmatprep.subr.bf16.mxu0 %v1225
        %1607 = vmatpush2.bf16.msra.mxu0 %v1224
        %1608 = vmatprep.subr.bf16.mxu0 %v1221
        %1609 = vmatpush2.bf16.msra.mxu0 %v1220
        %1610 = vmatprep.subr.bf16.mxu0 %v1217
        %1611 = vmatpush2.bf16.msra.mxu0 %v1216
        %1612 = vmatprep.mubr.bf16.mxu0 %v372
        %1613 = vmatmul.mubr.bf16.gmra.mxu0 %v371
        %v1614 = vpop.f32.mrf.mxu0
        %v1615 = vadd.f32 %v579, %v1614
        %v1616 = vpop.f32.mrf.mxu0
        %v1617 = vadd.f32 %v583, %v1616
        %v1618 = vpop.f32.mrf.mxu0
        %v1619 = vadd.f32 %v579, %v1618
        %v1620 = vpop.f32.mrf.mxu0
        %v1621 = vadd.f32 %v583, %v1620
        %1622 = vdwg.mxu0
        %1623 = vmatprep.subr.bf16.mxu0 %v1277
        %1624 = vmatpush1.bf16.msra.mxu0 %v1276
        %1625 = vmatprep.subr.bf16.mxu0 %v1273
        %1626 = vmatpush1.bf16.msra.mxu0 %v1272
        %1627 = vmatprep.subr.bf16.mxu0 %v1269
        %1628 = vmatpush1.bf16.msra.mxu0 %v1268
        %1629 = vmatprep.subr.bf16.mxu0 %v1265
        %1630 = vmatpush1.bf16.msra.mxu0 %v1264
        %1631 = vmatprep.subr.bf16.mxu0 %v1261
        %1632 = vmatpush1.bf16.msra.mxu0 %v1260
        %1633 = vmatprep.subr.bf16.mxu0 %v1257
        %1634 = vmatpush1.bf16.msra.mxu0 %v1256
        %1635 = vmatprep.subr.bf16.mxu0 %v1253
        %1636 = vmatpush1.bf16.msra.mxu0 %v1252
        %1637 = vmatprep.subr.bf16.mxu0 %v1249
        %1638 = vmatpush1.bf16.msra.mxu0 %v1248
        %1639 = vmatprep.subr.bf16.mxu0 %v1309
        %1640 = vmatpush2.bf16.msra.mxu0 %v1308
        %1641 = vmatprep.subr.bf16.mxu0 %v1305
        %1642 = vmatpush2.bf16.msra.mxu0 %v1304
        %1643 = vmatprep.subr.bf16.mxu0 %v1301
        %1644 = vmatpush2.bf16.msra.mxu0 %v1300
        %1645 = vmatprep.subr.bf16.mxu0 %v1297
        %1646 = vmatpush2.bf16.msra.mxu0 %v1296
        %1647 = vmatprep.subr.bf16.mxu0 %v1293
        %1648 = vmatpush2.bf16.msra.mxu0 %v1292
        %1649 = vmatprep.subr.bf16.mxu0 %v1289
        %1650 = vmatpush2.bf16.msra.mxu0 %v1288
        %1651 = vmatprep.subr.bf16.mxu0 %v1285
        %1652 = vmatpush2.bf16.msra.mxu0 %v1284
        %1653 = vmatprep.subr.bf16.mxu0 %v1281
        %1654 = vmatpush2.bf16.msra.mxu0 %v1280
        %1655 = vmatprep.mubr.bf16.mxu0 %v374
        %1656 = vmatmul.mubr.bf16.gmra.mxu0 %v373
        %v1657 = vpop.f32.mrf.mxu0
        %v1658 = vadd.f32 %v1615, %v1657
        %v1659 = vpop.f32.mrf.mxu0
        %v1660 = vadd.f32 %v1617, %v1659
        %v1661 = vpop.f32.mrf.mxu0
        %v1662 = vadd.f32 %v1619, %v1661
        %v1663 = vpop.f32.mrf.mxu0
        %v1664 = vadd.f32 %v1621, %v1663
        %1665 = vdwg.mxu0
        %1666 = vmatprep.subr.bf16.mxu0 %v1341
        %1667 = vmatpush1.bf16.msra.mxu0 %v1340
        %1668 = vmatprep.subr.bf16.mxu0 %v1337
        %1669 = vmatpush1.bf16.msra.mxu0 %v1336
        %1670 = vmatprep.subr.bf16.mxu0 %v1333
        %1671 = vmatpush1.bf16.msra.mxu0 %v1332
        %1672 = vmatprep.subr.bf16.mxu0 %v1329
        %1673 = vmatpush1.bf16.msra.mxu0 %v1328
        %1674 = vmatprep.subr.bf16.mxu0 %v1325
        %1675 = vmatpush1.bf16.msra.mxu0 %v1324
        %1676 = vmatprep.subr.bf16.mxu0 %v1321
        %1677 = vmatpush1.bf16.msra.mxu0 %v1320
        %1678 = vmatprep.subr.bf16.mxu0 %v1317
        %1679 = vmatpush1.bf16.msra.mxu0 %v1316
        %1680 = vmatprep.subr.bf16.mxu0 %v1313
        %1681 = vmatpush1.bf16.msra.mxu0 %v1312
        %1682 = vmatprep.subr.bf16.mxu0 %v1373
        %1683 = vmatpush2.bf16.msra.mxu0 %v1372
        %1684 = vmatprep.subr.bf16.mxu0 %v1369
        %1685 = vmatpush2.bf16.msra.mxu0 %v1368
        %1686 = vmatprep.subr.bf16.mxu0 %v1365
        %1687 = vmatpush2.bf16.msra.mxu0 %v1364
        %1688 = vmatprep.subr.bf16.mxu0 %v1361
        %1689 = vmatpush2.bf16.msra.mxu0 %v1360
        %1690 = vmatprep.subr.bf16.mxu0 %v1357
        %1691 = vmatpush2.bf16.msra.mxu0 %v1356
        %1692 = vmatprep.subr.bf16.mxu0 %v1353
        %1693 = vmatpush2.bf16.msra.mxu0 %v1352
        %1694 = vmatprep.subr.bf16.mxu0 %v1349
        %1695 = vmatpush2.bf16.msra.mxu0 %v1348
        %1696 = vmatprep.subr.bf16.mxu0 %v1345
        %1697 = vmatpush2.bf16.msra.mxu0 %v1344
        %1698 = vmatprep.mubr.bf16.mxu0 %v376
        %1699 = vmatmul.mubr.bf16.gmra.mxu0 %v375
        %v1700 = vpop.f32.mrf.mxu0
        %v1701 = vadd.f32 %v1658, %v1700
        %v1702 = vpop.f32.mrf.mxu0
        %v1703 = vadd.f32 %v1660, %v1702
        %v1704 = vpop.f32.mrf.mxu0
        %v1705 = vadd.f32 %v1662, %v1704
        %v1706 = vpop.f32.mrf.mxu0
        %v1707 = vadd.f32 %v1664, %v1706
        %1708 = vdwg.mxu0
        %1709 = vmatprep.subr.bf16.mxu0 0
        %1710 = vmatpush1.bf16.msra.mxu0 0
        %1711 = vmatprep.subr.bf16.mxu0 0
        %1712 = vmatpush1.bf16.msra.mxu0 0
        %1713 = vmatprep.subr.bf16.mxu0 0
        %1714 = vmatpush1.bf16.msra.mxu0 0
        %1715 = vmatprep.subr.bf16.mxu0 0
        %1716 = vmatpush1.bf16.msra.mxu0 0
        %1717 = vmatprep.subr.bf16.mxu0 0
        %1718 = vmatpush1.bf16.msra.mxu0 0
        %1719 = vmatprep.subr.bf16.mxu0 0
        %1720 = vmatpush1.bf16.msra.mxu0 0
        %1721 = vmatprep.subr.bf16.mxu0 0
        %1722 = vmatpush1.bf16.msra.mxu0 0
        %1723 = vmatprep.subr.bf16.mxu0 %v1377
        %1724 = vmatpush1.bf16.msra.mxu0 %v1376
        %1725 = vmatprep.subr.bf16.mxu0 0
        %1726 = vmatpush2.bf16.msra.mxu0 0
        %1727 = vmatprep.subr.bf16.mxu0 0
        %1728 = vmatpush2.bf16.msra.mxu0 0
        %1729 = vmatprep.subr.bf16.mxu0 0
        %1730 = vmatpush2.bf16.msra.mxu0 0
        %1731 = vmatprep.subr.bf16.mxu0 0
        %1732 = vmatpush2.bf16.msra.mxu0 0
        %1733 = vmatprep.subr.bf16.mxu0 0
        %1734 = vmatpush2.bf16.msra.mxu0 0
        %1735 = vmatprep.subr.bf16.mxu0 0
        %1736 = vmatpush2.bf16.msra.mxu0 0
        %1737 = vmatprep.subr.bf16.mxu0 0
        %1738 = vmatpush2.bf16.msra.mxu0 0
        %1739 = vmatprep.subr.bf16.mxu0 0
        %1740 = vmatpush2.bf16.msra.mxu0 0
        %1741 = vmatprep.mubr.bf16.mxu0 0
        %1742 = vmatmul.mubr.bf16.gmra.mxu0 %v1578
        %v1743 = vpop.f32.mrf.mxu0
        %v1744 = vadd.f32 %v1701, %v1743
        %v1745 = vpop.f32.mrf.mxu0
        %v1746 = vadd.f32 %v1703, %v1745
        %v1747 = vpop.f32.mrf.mxu0
        %v1748 = vadd.f32 %v1705, %v1747
        %v1749 = vpop.f32.mrf.mxu0
        %v1750 = vadd.f32 %v1707, %v1749
        %1751 = vdwg.mxu0
        %1752 = vmatprep.subr.bf16.mxu0 %v1215
        %1753 = vmatpush1.bf16.msra.mxu0 %v1214
        %1754 = vmatprep.subr.bf16.mxu0 %v1211
        %1755 = vmatpush1.bf16.msra.mxu0 %v1210
        %1756 = vmatprep.subr.bf16.mxu0 %v1207
        %1757 = vmatpush1.bf16.msra.mxu0 %v1206
        %1758 = vmatprep.subr.bf16.mxu0 %v1203
        %1759 = vmatpush1.bf16.msra.mxu0 %v1202
        %1760 = vmatprep.subr.bf16.mxu0 %v1199
        %1761 = vmatpush1.bf16.msra.mxu0 %v1198
        %1762 = vmatprep.subr.bf16.mxu0 %v1195
        %1763 = vmatpush1.bf16.msra.mxu0 %v1194
        %1764 = vmatprep.subr.bf16.mxu0 %v1191
        %1765 = vmatpush1.bf16.msra.mxu0 %v1190
        %1766 = vmatprep.subr.bf16.mxu0 %v1187
        %1767 = vmatpush1.bf16.msra.mxu0 %v1186
        %1768 = vmatprep.subr.bf16.mxu0 %v1247
        %1769 = vmatpush2.bf16.msra.mxu0 %v1246
        %1770 = vmatprep.subr.bf16.mxu0 %v1243
        %1771 = vmatpush2.bf16.msra.mxu0 %v1242
        %1772 = vmatprep.subr.bf16.mxu0 %v1239
        %1773 = vmatpush2.bf16.msra.mxu0 %v1238
        %1774 = vmatprep.subr.bf16.mxu0 %v1235
        %1775 = vmatpush2.bf16.msra.mxu0 %v1234
        %1776 = vmatprep.subr.bf16.mxu0 %v1231
        %1777 = vmatpush2.bf16.msra.mxu0 %v1230
        %1778 = vmatprep.subr.bf16.mxu0 %v1227
        %1779 = vmatpush2.bf16.msra.mxu0 %v1226
        %1780 = vmatprep.subr.bf16.mxu0 %v1223
        %1781 = vmatpush2.bf16.msra.mxu0 %v1222
        %1782 = vmatprep.subr.bf16.mxu0 %v1219
        %1783 = vmatpush2.bf16.msra.mxu0 %v1218
        %1784 = vmatprep.mubr.bf16.mxu0 %v372
        %1785 = vmatmul.mubr.bf16.gmra.mxu0 %v371
        %v1786 = vpop.f32.mrf.mxu0
        %v1787 = vadd.f32 %v587, %v1786
        %v1788 = vpop.f32.mrf.mxu0
        %v1789 = vadd.f32 %v591, %v1788
        %v1790 = vpop.f32.mrf.mxu0
        %v1791 = vadd.f32 %v587, %v1790
        %v1792 = vpop.f32.mrf.mxu0
        %v1793 = vadd.f32 %v591, %v1792
        %1794 = vdwg.mxu0
        %1795 = vmatprep.subr.bf16.mxu0 %v1279
        %1796 = vmatpush1.bf16.msra.mxu0 %v1278
        %1797 = vmatprep.subr.bf16.mxu0 %v1275
        %1798 = vmatpush1.bf16.msra.mxu0 %v1274
        %1799 = vmatprep.subr.bf16.mxu0 %v1271
        %1800 = vmatpush1.bf16.msra.mxu0 %v1270
        %1801 = vmatprep.subr.bf16.mxu0 %v1267
        %1802 = vmatpush1.bf16.msra.mxu0 %v1266
        %1803 = vmatprep.subr.bf16.mxu0 %v1263
        %1804 = vmatpush1.bf16.msra.mxu0 %v1262
        %1805 = vmatprep.subr.bf16.mxu0 %v1259
        %1806 = vmatpush1.bf16.msra.mxu0 %v1258
        %1807 = vmatprep.subr.bf16.mxu0 %v1255
        %1808 = vmatpush1.bf16.msra.mxu0 %v1254
        %1809 = vmatprep.subr.bf16.mxu0 %v1251
        %1810 = vmatpush1.bf16.msra.mxu0 %v1250
        %1811 = vmatprep.subr.bf16.mxu0 %v1311
        %1812 = vmatpush2.bf16.msra.mxu0 %v1310
        %1813 = vmatprep.subr.bf16.mxu0 %v1307
        %1814 = vmatpush2.bf16.msra.mxu0 %v1306
        %1815 = vmatprep.subr.bf16.mxu0 %v1303
        %1816 = vmatpush2.bf16.msra.mxu0 %v1302
        %1817 = vmatprep.subr.bf16.mxu0 %v1299
        %1818 = vmatpush2.bf16.msra.mxu0 %v1298
        %1819 = vmatprep.subr.bf16.mxu0 %v1295
        %1820 = vmatpush2.bf16.msra.mxu0 %v1294
        %1821 = vmatprep.subr.bf16.mxu0 %v1291
        %1822 = vmatpush2.bf16.msra.mxu0 %v1290
        %1823 = vmatprep.subr.bf16.mxu0 %v1287
        %1824 = vmatpush2.bf16.msra.mxu0 %v1286
        %1825 = vmatprep.subr.bf16.mxu0 %v1283
        %1826 = vmatpush2.bf16.msra.mxu0 %v1282
        %1827 = vmatprep.mubr.bf16.mxu0 %v374
        %1828 = vmatmul.mubr.bf16.gmra.mxu0 %v373
        %v1829 = vpop.f32.mrf.mxu0
        %v1830 = vadd.f32 %v1787, %v1829
        %v1831 = vpop.f32.mrf.mxu0
        %v1832 = vadd.f32 %v1789, %v1831
        %v1833 = vpop.f32.mrf.mxu0
        %v1834 = vadd.f32 %v1791, %v1833
        %v1835 = vpop.f32.mrf.mxu0
        %v1836 = vadd.f32 %v1793, %v1835
        %1837 = vdwg.mxu0
        %1838 = vmatprep.subr.bf16.mxu0 %v1343
        %1839 = vmatpush1.bf16.msra.mxu0 %v1342
        %1840 = vmatprep.subr.bf16.mxu0 %v1339
        %1841 = vmatpush1.bf16.msra.mxu0 %v1338
        %1842 = vmatprep.subr.bf16.mxu0 %v1335
        %1843 = vmatpush1.bf16.msra.mxu0 %v1334
        %1844 = vmatprep.subr.bf16.mxu0 %v1331
        %1845 = vmatpush1.bf16.msra.mxu0 %v1330
        %1846 = vmatprep.subr.bf16.mxu0 %v1327
        %1847 = vmatpush1.bf16.msra.mxu0 %v1326
        %1848 = vmatprep.subr.bf16.mxu0 %v1323
        %1849 = vmatpush1.bf16.msra.mxu0 %v1322
        %1850 = vmatprep.subr.bf16.mxu0 %v1319
        %1851 = vmatpush1.bf16.msra.mxu0 %v1318
        %1852 = vmatprep.subr.bf16.mxu0 %v1315
        %1853 = vmatpush1.bf16.msra.mxu0 %v1314
        %1854 = vmatprep.subr.bf16.mxu0 %v1375
        %1855 = vmatpush2.bf16.msra.mxu0 %v1374
        %1856 = vmatprep.subr.bf16.mxu0 %v1371
        %1857 = vmatpush2.bf16.msra.mxu0 %v1370
        %1858 = vmatprep.subr.bf16.mxu0 %v1367
        %1859 = vmatpush2.bf16.msra.mxu0 %v1366
        %1860 = vmatprep.subr.bf16.mxu0 %v1363
        %1861 = vmatpush2.bf16.msra.mxu0 %v1362
        %1862 = vmatprep.subr.bf16.mxu0 %v1359
        %1863 = vmatpush2.bf16.msra.mxu0 %v1358
        %1864 = vmatprep.subr.bf16.mxu0 %v1355
        %1865 = vmatpush2.bf16.msra.mxu0 %v1354
        %1866 = vmatprep.subr.bf16.mxu0 %v1351
        %1867 = vmatpush2.bf16.msra.mxu0 %v1350
        %1868 = vmatprep.subr.bf16.mxu0 %v1347
        %1869 = vmatpush2.bf16.msra.mxu0 %v1346
        %1870 = vmatprep.mubr.bf16.mxu0 %v376
        %1871 = vmatmul.mubr.bf16.gmra.mxu0 %v375
        %v1872 = vpop.f32.mrf.mxu0
        %v1873 = vadd.f32 %v1830, %v1872
        %v1874 = vpop.f32.mrf.mxu0
        %v1875 = vadd.f32 %v1832, %v1874
        %v1876 = vpop.f32.mrf.mxu0
        %v1877 = vadd.f32 %v1834, %v1876
        %v1878 = vpop.f32.mrf.mxu0
        %v1879 = vadd.f32 %v1836, %v1878
        %1880 = vdwg.mxu0
        %1881 = vmatprep.subr.bf16.mxu0 0
        %1882 = vmatpush1.bf16.msra.mxu0 0
        %1883 = vmatprep.subr.bf16.mxu0 0
        %1884 = vmatpush1.bf16.msra.mxu0 0
        %1885 = vmatprep.subr.bf16.mxu0 0
        %1886 = vmatpush1.bf16.msra.mxu0 0
        %1887 = vmatprep.subr.bf16.mxu0 0
        %1888 = vmatpush1.bf16.msra.mxu0 0
        %1889 = vmatprep.subr.bf16.mxu0 0
        %1890 = vmatpush1.bf16.msra.mxu0 0
        %1891 = vmatprep.subr.bf16.mxu0 0
        %1892 = vmatpush1.bf16.msra.mxu0 0
        %1893 = vmatprep.subr.bf16.mxu0 0
        %1894 = vmatpush1.bf16.msra.mxu0 0
        %1895 = vmatprep.subr.bf16.mxu0 %v1379
        %1896 = vmatpush1.bf16.msra.mxu0 %v1378
        %1897 = vmatprep.subr.bf16.mxu0 0
        %1898 = vmatpush2.bf16.msra.mxu0 0
        %1899 = vmatprep.subr.bf16.mxu0 0
        %1900 = vmatpush2.bf16.msra.mxu0 0
        %1901 = vmatprep.subr.bf16.mxu0 0
        %1902 = vmatpush2.bf16.msra.mxu0 0
        %1903 = vmatprep.subr.bf16.mxu0 0
        %1904 = vmatpush2.bf16.msra.mxu0 0
        %1905 = vmatprep.subr.bf16.mxu0 0
        %1906 = vmatpush2.bf16.msra.mxu0 0
        %1907 = vmatprep.subr.bf16.mxu0 0
        %1908 = vmatpush2.bf16.msra.mxu0 0
        %1909 = vmatprep.subr.bf16.mxu0 0
        %1910 = vmatpush2.bf16.msra.mxu0 0
        %1911 = vmatprep.subr.bf16.mxu0 0
        %1912 = vmatpush2.bf16.msra.mxu0 0
        %1913 = vmatprep.mubr.bf16.mxu0 0
        %1914 = vmatmul.mubr.bf16.gmra.mxu0 %v1578
        %v1915 = vpop.f32.mrf.mxu0
        %v1916 = vadd.f32 %v1873, %v1915
        %v1917 = vpop.f32.mrf.mxu0
        %v1918 = vadd.f32 %v1875, %v1917
        %v1919 = vpop.f32.mrf.mxu0
        %v1920 = vadd.f32 %v1877, %v1919
        %v1921 = vpop.f32.mrf.mxu0
        %v1922 = vadd.f32 %v1879, %v1921
        %1923 = vdwg.mxu0
        %v1924 = vmax.f32 %v1744, 0.0
        %v1925 = vmax.f32 %v1746, 0.0
        %v1926 = vmax.f32 %v1916, 0.0
        %v1927 = vmax.f32 %v1918, 0.0
        %v1928 = vmax.f32 %v1748, 0.0
        %v1929 = vmax.f32 %v1750, 0.0
        %v1930 = vmax.f32 %v1920, 0.0
        %v1931 = vmax.f32 %v1922, 0.0
        %v1932 = vpack.c.bf16 %v1928, %v1924
        %v1933 = vpack.c.bf16 %v1929, %v1925
        %v1934 = vpack.c.bf16 %v1930, %v1926
        %v1935 = vpack.c.bf16 %v1931, %v1927
        %v1936 = vld [vmem:[#allocation8] sm:$0xff]
        %v1937 = vld [vmem:[#allocation8 + $0x8] sm:$0xff]
        %v1938 = vld [vmem:[#allocation8 + $0x10] sm:$0xff]
        %v1939 = vld [vmem:[#allocation8 + $0x18] sm:$0xff]
        %v1940 = vld [vmem:[#allocation8 + $0x20] sm:$0xff]
        %v1941 = vld [vmem:[#allocation8 + $0x28] sm:$0xff]
        %v1942 = vld [vmem:[#allocation8 + $0x30] sm:$0xff]
        %v1943 = vld [vmem:[#allocation8 + $0x38] sm:$0xff]
        %v1944 = vld [vmem:[#allocation8 + $0x40] sm:$0xff]
        %v1945 = vld [vmem:[#allocation8 + $0x48] sm:$0xff]
        %v1946 = vld [vmem:[#allocation8 + $0x50] sm:$0xff]
        %v1947 = vld [vmem:[#allocation8 + $0x58] sm:$0xff]
        %v1948 = vld [vmem:[#allocation8 + $0x60] sm:$0xff]
        %v1949 = vld [vmem:[#allocation8 + $0x68] sm:$0xff]
        %v1950 = vld [vmem:[#allocation8 + $0x70] sm:$0xff]
        %v1951 = vld [vmem:[#allocation8 + $0x78] sm:$0xff]
        %v1952 = vld [vmem:[#allocation8 + $0x80] sm:$0xff]
        %v1953 = vld [vmem:[#allocation8 + $0x88] sm:$0xff]
        %v1954 = vld [vmem:[#allocation8 + $0x90] sm:$0xff]
        %v1955 = vld [vmem:[#allocation8 + $0x98] sm:$0xff]
        %v1956 = vld [vmem:[#allocation8 + $0xa0] sm:$0xff]
        %v1957 = vld [vmem:[#allocation8 + $0xa8] sm:$0xff]
        %v1958 = vld [vmem:[#allocation8 + $0xb0] sm:$0xff]
        %v1959 = vld [vmem:[#allocation8 + $0xb8] sm:$0xff]
        %v1960 = vld [vmem:[#allocation8 + $0xc0] sm:$0xff]
        %v1961 = vld [vmem:[#allocation8 + $0xc8] sm:$0xff]
        %v1962 = vld [vmem:[#allocation8 + $0xd0] sm:$0xff]
        %v1963 = vld [vmem:[#allocation8 + $0xd8] sm:$0xff]
        %v1964 = vld [vmem:[#allocation8 + $0xe0] sm:$0xff]
        %v1965 = vld [vmem:[#allocation8 + $0xe8] sm:$0xff]
        %v1966 = vld [vmem:[#allocation8 + $0xf0] sm:$0xff]
        %v1967 = vld [vmem:[#allocation8 + $0xf8] sm:$0xff]
        %v1968 = vld [vmem:[#allocation8 + $0x100] sm:$0xff]
        %v1969 = vld [vmem:[#allocation8 + $0x108] sm:$0xff]
        %v1970 = vld [vmem:[#allocation8 + $0x110] sm:$0xff]
        %v1971 = vld [vmem:[#allocation8 + $0x118] sm:$0xff]
        %v1972 = vld [vmem:[#allocation8 + $0x120] sm:$0xff]
        %v1973 = vld [vmem:[#allocation8 + $0x128] sm:$0xff]
        %v1974 = vld [vmem:[#allocation8 + $0x130] sm:$0xff]
        %v1975 = vld [vmem:[#allocation8 + $0x138] sm:$0xff]
        %v1976 = vld [vmem:[#allocation8 + $0x140] sm:$0xff]
        %v1977 = vld [vmem:[#allocation8 + $0x148] sm:$0xff]
        %v1978 = vld [vmem:[#allocation8 + $0x150] sm:$0xff]
        %v1979 = vld [vmem:[#allocation8 + $0x158] sm:$0xff]
        %v1980 = vld [vmem:[#allocation8 + $0x160] sm:$0xff]
        %v1981 = vld [vmem:[#allocation8 + $0x168] sm:$0xff]
        %v1982 = vld [vmem:[#allocation8 + $0x170] sm:$0xff]
        %v1983 = vld [vmem:[#allocation8 + $0x178] sm:$0xff]
        %v1984 = vld [vmem:[#allocation8 + $0x180] sm:$0xff]
        %v1985 = vld [vmem:[#allocation8 + $0x188] sm:$0xff]
        %v1986 = vld [vmem:[#allocation8 + $0x190] sm:$0xff]
        %v1987 = vld [vmem:[#allocation8 + $0x198] sm:$0xff]
        %v1988 = vld [vmem:[#allocation8 + $0x1a0] sm:$0xff]
        %v1989 = vld [vmem:[#allocation8 + $0x1a8] sm:$0xff]
        %v1990 = vld [vmem:[#allocation8 + $0x1b0] sm:$0xff]
        %v1991 = vld [vmem:[#allocation8 + $0x1b8] sm:$0xff]
        %v1992 = vld [vmem:[#allocation8 + $0x1c0] sm:$0xff]
        %v1993 = vld [vmem:[#allocation8 + $0x1c8] sm:$0xff]
        %v1994 = vld [vmem:[#allocation8 + $0x1d0] sm:$0xff]
        %v1995 = vld [vmem:[#allocation8 + $0x1d8] sm:$0xff]
        %v1996 = vld [vmem:[#allocation8 + $0x1e0] sm:$0xff]
        %v1997 = vld [vmem:[#allocation8 + $0x1e8] sm:$0xff]
        %v1998 = vld [vmem:[#allocation8 + $0x1f0] sm:$0xff]
        %v1999 = vld [vmem:[#allocation8 + $0x1f8] sm:$0xff]
        %v2000 = vld [vmem:[#allocation8 + $0x200] sm:$0xff]
        %v2001 = vld [vmem:[#allocation8 + $0x208] sm:$0xff]
        %v2002 = vld [vmem:[#allocation8 + $0x210] sm:$0xff]
        %v2003 = vld [vmem:[#allocation8 + $0x218] sm:$0xff]
        %v2004 = vld [vmem:[#allocation8 + $0x220] sm:$0xff]
        %v2005 = vld [vmem:[#allocation8 + $0x228] sm:$0xff]
        %v2006 = vld [vmem:[#allocation8 + $0x230] sm:$0xff]
        %v2007 = vld [vmem:[#allocation8 + $0x238] sm:$0xff]
        %v2008 = vld [vmem:[#allocation8 + $0x240] sm:$0xff]
        %v2009 = vld [vmem:[#allocation8 + $0x248] sm:$0xff]
        %v2010 = vld [vmem:[#allocation8 + $0x250] sm:$0xff]
        %v2011 = vld [vmem:[#allocation8 + $0x258] sm:$0xff]
        %v2012 = vld [vmem:[#allocation8 + $0x260] sm:$0xff]
        %v2013 = vld [vmem:[#allocation8 + $0x268] sm:$0xff]
        %v2014 = vld [vmem:[#allocation8 + $0x270] sm:$0xff]
        %v2015 = vld [vmem:[#allocation8 + $0x278] sm:$0xff]
        %v2016 = vld [vmem:[#allocation8 + $0x280] sm:$0xff]
        %v2017 = vld [vmem:[#allocation8 + $0x288] sm:$0xff]
        %v2018 = vld [vmem:[#allocation8 + $0x290] sm:$0xff]
        %v2019 = vld [vmem:[#allocation8 + $0x298] sm:$0xff]
        %v2020 = vld [vmem:[#allocation8 + $0x2a0] sm:$0xff]
        %v2021 = vld [vmem:[#allocation8 + $0x2a8] sm:$0xff]
        %v2022 = vld [vmem:[#allocation8 + $0x2b0] sm:$0xff]
        %v2023 = vld [vmem:[#allocation8 + $0x2b8] sm:$0xff]
        %v2024 = vld [vmem:[#allocation8 + $0x2c0] sm:$0xff]
        %v2025 = vld [vmem:[#allocation8 + $0x2c8] sm:$0xff]
        %v2026 = vld [vmem:[#allocation8 + $0x2d0] sm:$0xff]
        %v2027 = vld [vmem:[#allocation8 + $0x2d8] sm:$0xff]
        %v2028 = vld [vmem:[#allocation8 + $0x2e0] sm:$0xff]
        %v2029 = vld [vmem:[#allocation8 + $0x2e8] sm:$0xff]
        %v2030 = vld [vmem:[#allocation8 + $0x2f0] sm:$0xff]
        %v2031 = vld [vmem:[#allocation8 + $0x2f8] sm:$0xff]
        %v2032 = vld [vmem:[#allocation8 + $0x300] sm:$0xff]
        %v2033 = vld [vmem:[#allocation8 + $0x308] sm:$0xff]
        %v2034 = vld [vmem:[#allocation8 + $0x310] sm:$0xff]
        %v2035 = vld [vmem:[#allocation8 + $0x318] sm:$0xff]
        %v2036 = vld [vmem:[#allocation8 + $0x320] sm:$0xff]
        %v2037 = vld [vmem:[#allocation8 + $0x328] sm:$0xff]
        %v2038 = vld [vmem:[#allocation8 + $0x330] sm:$0xff]
        %v2039 = vld [vmem:[#allocation8 + $0x338] sm:$0xff]
        %v2040 = vld [vmem:[#allocation8 + $0x340] sm:$0xff]
        %v2041 = vld [vmem:[#allocation8 + $0x348] sm:$0xff]
        %v2042 = vld [vmem:[#allocation8 + $0x350] sm:$0xff]
        %v2043 = vld [vmem:[#allocation8 + $0x358] sm:$0xff]
        %v2044 = vld [vmem:[#allocation8 + $0x360] sm:$0xff]
        %v2045 = vld [vmem:[#allocation8 + $0x368] sm:$0xff]
        %v2046 = vld [vmem:[#allocation8 + $0x370] sm:$0xff]
        %v2047 = vld [vmem:[#allocation8 + $0x378] sm:$0xff]
        %v2048 = vld [vmem:[#allocation8 + $0x380] sm:$0xff]
        %v2049 = vld [vmem:[#allocation8 + $0x388] sm:$0xff]
        %v2050 = vld [vmem:[#allocation8 + $0x390] sm:$0xff]
        %v2051 = vld [vmem:[#allocation8 + $0x398] sm:$0xff]
        %v2052 = vld [vmem:[#allocation8 + $0x3a0] sm:$0xff]
        %v2053 = vld [vmem:[#allocation8 + $0x3a8] sm:$0xff]
        %v2054 = vld [vmem:[#allocation8 + $0x3b0] sm:$0xff]
        %v2055 = vld [vmem:[#allocation8 + $0x3b8] sm:$0xff]
        %v2056 = vld [vmem:[#allocation8 + $0x3c0] sm:$0xff]
        %v2057 = vld [vmem:[#allocation8 + $0x3c8] sm:$0xff]
        %v2058 = vld [vmem:[#allocation8 + $0x3d0] sm:$0xff]
        %v2059 = vld [vmem:[#allocation8 + $0x3d8] sm:$0xff]
        %v2060 = vld [vmem:[#allocation8 + $0x3e0] sm:$0xff]
        %v2061 = vld [vmem:[#allocation8 + $0x3e8] sm:$0xff]
        %v2062 = vld [vmem:[#allocation8 + $0x3f0] sm:$0xff]
        %v2063 = vld [vmem:[#allocation8 + $0x3f8] sm:$0xff]
        %v2064 = vld [vmem:[%s4] sm:$0xf]
        %v2066 = vlaneseq
        %v2067 = vshrl.u32 %v2066, 7
        %v2068 = vsub.s32 0, %v2067
        %v2069 = vrot.slane %v2064, %v2068
        %v2070 = vlaneseq
        %v2071 = vshrl.u32 %v2070, 7
        %v2072 = vsub.s32 1, %v2071
        %v2073 = vrot.slane %v2064, %v2072
        %v2074 = vlaneseq
        %v2075 = vshrl.u32 %v2074, 7
        %v2076 = vsub.s32 2, %v2075
        %v2077 = vrot.slane %v2064, %v2076
        %v2078 = vlaneseq
        %v2079 = vshrl.u32 %v2078, 7
        %v2080 = vsub.s32 3, %v2079
        %v2081 = vrot.slane %v2064, %v2080
        %v2214 = vunpack.c.l.b16 %v1936
        %v2215 = vunpack.c.h.b16 %v1936
        %v2216 = vunpack.c.l.b16 %v1937
        %v2217 = vunpack.c.h.b16 %v1937
        %v2218 = vunpack.c.l.b16 %v1938
        %v2219 = vunpack.c.h.b16 %v1938
        %v2220 = vunpack.c.l.b16 %v1939
        %v2221 = vunpack.c.h.b16 %v1939
        %v2222 = vunpack.c.l.b16 %v1940
        %v2223 = vunpack.c.h.b16 %v1940
        %v2224 = vunpack.c.l.b16 %v1941
        %v2225 = vunpack.c.h.b16 %v1941
        %v2226 = vunpack.c.l.b16 %v1942
        %v2227 = vunpack.c.h.b16 %v1942
        %v2228 = vunpack.c.l.b16 %v1943
        %v2229 = vunpack.c.h.b16 %v1943
        %v2230 = vunpack.c.l.b16 %v1944
        %v2231 = vunpack.c.h.b16 %v1944
        %v2232 = vunpack.c.l.b16 %v1945
        %v2233 = vunpack.c.h.b16 %v1945
        %v2234 = vunpack.c.l.b16 %v1946
        %v2235 = vunpack.c.h.b16 %v1946
        %v2236 = vunpack.c.l.b16 %v1947
        %v2237 = vunpack.c.h.b16 %v1947
        %v2238 = vunpack.c.l.b16 %v1948
        %v2239 = vunpack.c.h.b16 %v1948
        %v2240 = vunpack.c.l.b16 %v1949
        %v2241 = vunpack.c.h.b16 %v1949
        %v2242 = vunpack.c.l.b16 %v1950
        %v2243 = vunpack.c.h.b16 %v1950
        %v2244 = vunpack.c.l.b16 %v1951
        %v2245 = vunpack.c.h.b16 %v1951
        %v2246 = vunpack.c.l.b16 %v1952
        %v2247 = vunpack.c.h.b16 %v1952
        %v2248 = vunpack.c.l.b16 %v1953
        %v2249 = vunpack.c.h.b16 %v1953
        %v2250 = vunpack.c.l.b16 %v1954
        %v2251 = vunpack.c.h.b16 %v1954
        %v2252 = vunpack.c.l.b16 %v1955
        %v2253 = vunpack.c.h.b16 %v1955
        %v2254 = vunpack.c.l.b16 %v1956
        %v2255 = vunpack.c.h.b16 %v1956
        %v2256 = vunpack.c.l.b16 %v1957
        %v2257 = vunpack.c.h.b16 %v1957
        %v2258 = vunpack.c.l.b16 %v1958
        %v2259 = vunpack.c.h.b16 %v1958
        %v2260 = vunpack.c.l.b16 %v1959
        %v2261 = vunpack.c.h.b16 %v1959
        %v2262 = vunpack.c.l.b16 %v1960
        %v2263 = vunpack.c.h.b16 %v1960
        %v2264 = vunpack.c.l.b16 %v1961
        %v2265 = vunpack.c.h.b16 %v1961
        %v2266 = vunpack.c.l.b16 %v1962
        %v2267 = vunpack.c.h.b16 %v1962
        %v2268 = vunpack.c.l.b16 %v1963
        %v2269 = vunpack.c.h.b16 %v1963
        %v2270 = vunpack.c.l.b16 %v1964
        %v2271 = vunpack.c.h.b16 %v1964
        %v2272 = vunpack.c.l.b16 %v1965
        %v2273 = vunpack.c.h.b16 %v1965
        %v2274 = vunpack.c.l.b16 %v1966
        %v2275 = vunpack.c.h.b16 %v1966
        %v2276 = vunpack.c.l.b16 %v1967
        %v2277 = vunpack.c.h.b16 %v1967
        %v2278 = vunpack.c.l.b16 %v1968
        %v2279 = vunpack.c.h.b16 %v1968
        %v2280 = vunpack.c.l.b16 %v1969
        %v2281 = vunpack.c.h.b16 %v1969
        %v2282 = vunpack.c.l.b16 %v1970
        %v2283 = vunpack.c.h.b16 %v1970
        %v2284 = vunpack.c.l.b16 %v1971
        %v2285 = vunpack.c.h.b16 %v1971
        %v2286 = vunpack.c.l.b16 %v1972
        %v2287 = vunpack.c.h.b16 %v1972
        %v2288 = vunpack.c.l.b16 %v1973
        %v2289 = vunpack.c.h.b16 %v1973
        %v2290 = vunpack.c.l.b16 %v1974
        %v2291 = vunpack.c.h.b16 %v1974
        %v2292 = vunpack.c.l.b16 %v1975
        %v2293 = vunpack.c.h.b16 %v1975
        %v2294 = vunpack.c.l.b16 %v1976
        %v2295 = vunpack.c.h.b16 %v1976
        %v2296 = vunpack.c.l.b16 %v1977
        %v2297 = vunpack.c.h.b16 %v1977
        %v2298 = vunpack.c.l.b16 %v1978
        %v2299 = vunpack.c.h.b16 %v1978
        %v2300 = vunpack.c.l.b16 %v1979
        %v2301 = vunpack.c.h.b16 %v1979
        %v2302 = vunpack.c.l.b16 %v1980
        %v2303 = vunpack.c.h.b16 %v1980
        %v2304 = vunpack.c.l.b16 %v1981
        %v2305 = vunpack.c.h.b16 %v1981
        %v2306 = vunpack.c.l.b16 %v1982
        %v2307 = vunpack.c.h.b16 %v1982
        %v2308 = vunpack.c.l.b16 %v1983
        %v2309 = vunpack.c.h.b16 %v1983
        %v2310 = vunpack.c.l.b16 %v1984
        %v2311 = vunpack.c.h.b16 %v1984
        %v2312 = vunpack.c.l.b16 %v1985
        %v2313 = vunpack.c.h.b16 %v1985
        %v2314 = vunpack.c.l.b16 %v1986
        %v2315 = vunpack.c.h.b16 %v1986
        %v2316 = vunpack.c.l.b16 %v1987
        %v2317 = vunpack.c.h.b16 %v1987
        %v2318 = vunpack.c.l.b16 %v1988
        %v2319 = vunpack.c.h.b16 %v1988
        %v2320 = vunpack.c.l.b16 %v1989
        %v2321 = vunpack.c.h.b16 %v1989
        %v2322 = vunpack.c.l.b16 %v1990
        %v2323 = vunpack.c.h.b16 %v1990
        %v2324 = vunpack.c.l.b16 %v1991
        %v2325 = vunpack.c.h.b16 %v1991
        %v2326 = vunpack.c.l.b16 %v1992
        %v2327 = vunpack.c.h.b16 %v1992
        %v2328 = vunpack.c.l.b16 %v1993
        %v2329 = vunpack.c.h.b16 %v1993
        %v2330 = vunpack.c.l.b16 %v1994
        %v2331 = vunpack.c.h.b16 %v1994
        %v2332 = vunpack.c.l.b16 %v1995
        %v2333 = vunpack.c.h.b16 %v1995
        %v2334 = vunpack.c.l.b16 %v1996
        %v2335 = vunpack.c.h.b16 %v1996
        %v2336 = vunpack.c.l.b16 %v1997
        %v2337 = vunpack.c.h.b16 %v1997
        %v2338 = vunpack.c.l.b16 %v1998
        %v2339 = vunpack.c.h.b16 %v1998
        %v2340 = vunpack.c.l.b16 %v1999
        %v2341 = vunpack.c.h.b16 %v1999
        %v2342 = vunpack.c.l.b16 %v2000
        %v2343 = vunpack.c.h.b16 %v2000
        %v2344 = vunpack.c.l.b16 %v2001
        %v2345 = vunpack.c.h.b16 %v2001
        %v2346 = vunpack.c.l.b16 %v2002
        %v2347 = vunpack.c.h.b16 %v2002
        %v2348 = vunpack.c.l.b16 %v2003
        %v2349 = vunpack.c.h.b16 %v2003
        %v2350 = vunpack.c.l.b16 %v2004
        %v2351 = vunpack.c.h.b16 %v2004
        %v2352 = vunpack.c.l.b16 %v2005
        %v2353 = vunpack.c.h.b16 %v2005
        %v2354 = vunpack.c.l.b16 %v2006
        %v2355 = vunpack.c.h.b16 %v2006
        %v2356 = vunpack.c.l.b16 %v2007
        %v2357 = vunpack.c.h.b16 %v2007
        %v2358 = vunpack.c.l.b16 %v2008
        %v2359 = vunpack.c.h.b16 %v2008
        %v2360 = vunpack.c.l.b16 %v2009
        %v2361 = vunpack.c.h.b16 %v2009
        %v2362 = vunpack.c.l.b16 %v2010
        %v2363 = vunpack.c.h.b16 %v2010
        %v2364 = vunpack.c.l.b16 %v2011
        %v2365 = vunpack.c.h.b16 %v2011
        %v2366 = vunpack.c.l.b16 %v2012
        %v2367 = vunpack.c.h.b16 %v2012
        %v2368 = vunpack.c.l.b16 %v2013
        %v2369 = vunpack.c.h.b16 %v2013
        %v2370 = vunpack.c.l.b16 %v2014
        %v2371 = vunpack.c.h.b16 %v2014
        %v2372 = vunpack.c.l.b16 %v2015
        %v2373 = vunpack.c.h.b16 %v2015
        %v2374 = vunpack.c.l.b16 %v2016
        %v2375 = vunpack.c.h.b16 %v2016
        %v2376 = vunpack.c.l.b16 %v2017
        %v2377 = vunpack.c.h.b16 %v2017
        %v2378 = vunpack.c.l.b16 %v2018
        %v2379 = vunpack.c.h.b16 %v2018
        %v2380 = vunpack.c.l.b16 %v2019
        %v2381 = vunpack.c.h.b16 %v2019
        %v2382 = vunpack.c.l.b16 %v2020
        %v2383 = vunpack.c.h.b16 %v2020
        %v2384 = vunpack.c.l.b16 %v2021
        %v2385 = vunpack.c.h.b16 %v2021
        %v2386 = vunpack.c.l.b16 %v2022
        %v2387 = vunpack.c.h.b16 %v2022
        %v2388 = vunpack.c.l.b16 %v2023
        %v2389 = vunpack.c.h.b16 %v2023
        %v2390 = vunpack.c.l.b16 %v2024
        %v2391 = vunpack.c.h.b16 %v2024
        %v2392 = vunpack.c.l.b16 %v2025
        %v2393 = vunpack.c.h.b16 %v2025
        %v2394 = vunpack.c.l.b16 %v2026
        %v2395 = vunpack.c.h.b16 %v2026
        %v2396 = vunpack.c.l.b16 %v2027
        %v2397 = vunpack.c.h.b16 %v2027
        %v2398 = vunpack.c.l.b16 %v2028
        %v2399 = vunpack.c.h.b16 %v2028
        %v2400 = vunpack.c.l.b16 %v2029
        %v2401 = vunpack.c.h.b16 %v2029
        %v2402 = vunpack.c.l.b16 %v2030
        %v2403 = vunpack.c.h.b16 %v2030
        %v2404 = vunpack.c.l.b16 %v2031
        %v2405 = vunpack.c.h.b16 %v2031
        %v2406 = vunpack.c.l.b16 %v2032
        %v2407 = vunpack.c.h.b16 %v2032
        %v2408 = vunpack.c.l.b16 %v2033
        %v2409 = vunpack.c.h.b16 %v2033
        %v2410 = vunpack.c.l.b16 %v2034
        %v2411 = vunpack.c.h.b16 %v2034
        %v2412 = vunpack.c.l.b16 %v2035
        %v2413 = vunpack.c.h.b16 %v2035
        %v2414 = vunpack.c.l.b16 %v2036
        %v2415 = vunpack.c.h.b16 %v2036
        %v2416 = vunpack.c.l.b16 %v2037
        %v2417 = vunpack.c.h.b16 %v2037
        %v2418 = vunpack.c.l.b16 %v2038
        %v2419 = vunpack.c.h.b16 %v2038
        %v2420 = vunpack.c.l.b16 %v2039
        %v2421 = vunpack.c.h.b16 %v2039
        %v2422 = vunpack.c.l.b16 %v2040
        %v2423 = vunpack.c.h.b16 %v2040
        %v2424 = vunpack.c.l.b16 %v2041
        %v2425 = vunpack.c.h.b16 %v2041
        %v2426 = vunpack.c.l.b16 %v2042
        %v2427 = vunpack.c.h.b16 %v2042
        %v2428 = vunpack.c.l.b16 %v2043
        %v2429 = vunpack.c.h.b16 %v2043
        %v2430 = vunpack.c.l.b16 %v2044
        %v2431 = vunpack.c.h.b16 %v2044
        %v2432 = vunpack.c.l.b16 %v2045
        %v2433 = vunpack.c.h.b16 %v2045
        %v2434 = vunpack.c.l.b16 %v2046
        %v2435 = vunpack.c.h.b16 %v2046
        %v2436 = vunpack.c.l.b16 %v2047
        %v2437 = vunpack.c.h.b16 %v2047
        %v2438 = vunpack.c.l.b16 %v2048
        %v2439 = vunpack.c.h.b16 %v2048
        %v2440 = vunpack.c.l.b16 %v2049
        %v2441 = vunpack.c.h.b16 %v2049
        %v2442 = vunpack.c.l.b16 %v2050
        %v2443 = vunpack.c.h.b16 %v2050
        %v2444 = vunpack.c.l.b16 %v2051
        %v2445 = vunpack.c.h.b16 %v2051
        %v2446 = vunpack.c.l.b16 %v2052
        %v2447 = vunpack.c.h.b16 %v2052
        %v2448 = vunpack.c.l.b16 %v2053
        %v2449 = vunpack.c.h.b16 %v2053
        %v2450 = vunpack.c.l.b16 %v2054
        %v2451 = vunpack.c.h.b16 %v2054
        %v2452 = vunpack.c.l.b16 %v2055
        %v2453 = vunpack.c.h.b16 %v2055
        %v2454 = vunpack.c.l.b16 %v2056
        %v2455 = vunpack.c.h.b16 %v2056
        %v2456 = vunpack.c.l.b16 %v2057
        %v2457 = vunpack.c.h.b16 %v2057
        %v2458 = vunpack.c.l.b16 %v2058
        %v2459 = vunpack.c.h.b16 %v2058
        %v2460 = vunpack.c.l.b16 %v2059
        %v2461 = vunpack.c.h.b16 %v2059
        %v2462 = vunpack.c.l.b16 %v2060
        %v2463 = vunpack.c.h.b16 %v2060
        %v2464 = vunpack.c.l.b16 %v2061
        %v2465 = vunpack.c.h.b16 %v2061
        %v2466 = vunpack.c.l.b16 %v2062
        %v2467 = vunpack.c.h.b16 %v2062
        %v2468 = vunpack.c.l.b16 %v2063
        %v2469 = vunpack.c.h.b16 %v2063
        %v2470 = vpack.c.b16 %v2218, %v2214
        %v2471 = vpack.c.b16 %v2219, %v2215
        %v2472 = vpack.c.b16 %v2220, %v2216
        %v2473 = vpack.c.b16 %v2221, %v2217
        %v2474 = vpack.c.b16 %v2226, %v2222
        %v2475 = vpack.c.b16 %v2227, %v2223
        %v2476 = vpack.c.b16 %v2228, %v2224
        %v2477 = vpack.c.b16 %v2229, %v2225
        %v2478 = vpack.c.b16 %v2234, %v2230
        %v2479 = vpack.c.b16 %v2235, %v2231
        %v2480 = vpack.c.b16 %v2236, %v2232
        %v2481 = vpack.c.b16 %v2237, %v2233
        %v2482 = vpack.c.b16 %v2242, %v2238
        %v2483 = vpack.c.b16 %v2243, %v2239
        %v2484 = vpack.c.b16 %v2244, %v2240
        %v2485 = vpack.c.b16 %v2245, %v2241
        %v2486 = vpack.c.b16 %v2250, %v2246
        %v2487 = vpack.c.b16 %v2251, %v2247
        %v2488 = vpack.c.b16 %v2252, %v2248
        %v2489 = vpack.c.b16 %v2253, %v2249
        %v2490 = vpack.c.b16 %v2258, %v2254
        %v2491 = vpack.c.b16 %v2259, %v2255
        %v2492 = vpack.c.b16 %v2260, %v2256
        %v2493 = vpack.c.b16 %v2261, %v2257
        %v2494 = vpack.c.b16 %v2266, %v2262
        %v2495 = vpack.c.b16 %v2267, %v2263
        %v2496 = vpack.c.b16 %v2268, %v2264
        %v2497 = vpack.c.b16 %v2269, %v2265
        %v2498 = vpack.c.b16 %v2274, %v2270
        %v2499 = vpack.c.b16 %v2275, %v2271
        %v2500 = vpack.c.b16 %v2276, %v2272
        %v2501 = vpack.c.b16 %v2277, %v2273
        %v2502 = vpack.c.b16 %v2282, %v2278
        %v2503 = vpack.c.b16 %v2283, %v2279
        %v2504 = vpack.c.b16 %v2284, %v2280
        %v2505 = vpack.c.b16 %v2285, %v2281
        %v2506 = vpack.c.b16 %v2290, %v2286
        %v2507 = vpack.c.b16 %v2291, %v2287
        %v2508 = vpack.c.b16 %v2292, %v2288
        %v2509 = vpack.c.b16 %v2293, %v2289
        %v2510 = vpack.c.b16 %v2298, %v2294
        %v2511 = vpack.c.b16 %v2299, %v2295
        %v2512 = vpack.c.b16 %v2300, %v2296
        %v2513 = vpack.c.b16 %v2301, %v2297
        %v2514 = vpack.c.b16 %v2306, %v2302
        %v2515 = vpack.c.b16 %v2307, %v2303
        %v2516 = vpack.c.b16 %v2308, %v2304
        %v2517 = vpack.c.b16 %v2309, %v2305
        %v2518 = vpack.c.b16 %v2314, %v2310
        %v2519 = vpack.c.b16 %v2315, %v2311
        %v2520 = vpack.c.b16 %v2316, %v2312
        %v2521 = vpack.c.b16 %v2317, %v2313
        %v2522 = vpack.c.b16 %v2322, %v2318
        %v2523 = vpack.c.b16 %v2323, %v2319
        %v2524 = vpack.c.b16 %v2324, %v2320
        %v2525 = vpack.c.b16 %v2325, %v2321
        %v2526 = vpack.c.b16 %v2330, %v2326
        %v2527 = vpack.c.b16 %v2331, %v2327
        %v2528 = vpack.c.b16 %v2332, %v2328
        %v2529 = vpack.c.b16 %v2333, %v2329
        %v2530 = vpack.c.b16 %v2338, %v2334
        %v2531 = vpack.c.b16 %v2339, %v2335
        %v2532 = vpack.c.b16 %v2340, %v2336
        %v2533 = vpack.c.b16 %v2341, %v2337
        %v2534 = vpack.c.b16 %v2346, %v2342
        %v2535 = vpack.c.b16 %v2347, %v2343
        %v2536 = vpack.c.b16 %v2348, %v2344
        %v2537 = vpack.c.b16 %v2349, %v2345
        %v2538 = vpack.c.b16 %v2354, %v2350
        %v2539 = vpack.c.b16 %v2355, %v2351
        %v2540 = vpack.c.b16 %v2356, %v2352
        %v2541 = vpack.c.b16 %v2357, %v2353
        %v2542 = vpack.c.b16 %v2362, %v2358
        %v2543 = vpack.c.b16 %v2363, %v2359
        %v2544 = vpack.c.b16 %v2364, %v2360
        %v2545 = vpack.c.b16 %v2365, %v2361
        %v2546 = vpack.c.b16 %v2370, %v2366
        %v2547 = vpack.c.b16 %v2371, %v2367
        %v2548 = vpack.c.b16 %v2372, %v2368
        %v2549 = vpack.c.b16 %v2373, %v2369
        %v2550 = vpack.c.b16 %v2378, %v2374
        %v2551 = vpack.c.b16 %v2379, %v2375
        %v2552 = vpack.c.b16 %v2380, %v2376
        %v2553 = vpack.c.b16 %v2381, %v2377
        %v2554 = vpack.c.b16 %v2386, %v2382
        %v2555 = vpack.c.b16 %v2387, %v2383
        %v2556 = vpack.c.b16 %v2388, %v2384
        %v2557 = vpack.c.b16 %v2389, %v2385
        %v2558 = vpack.c.b16 %v2394, %v2390
        %v2559 = vpack.c.b16 %v2395, %v2391
        %v2560 = vpack.c.b16 %v2396, %v2392
        %v2561 = vpack.c.b16 %v2397, %v2393
        %v2562 = vpack.c.b16 %v2402, %v2398
        %v2563 = vpack.c.b16 %v2403, %v2399
        %v2564 = vpack.c.b16 %v2404, %v2400
        %v2565 = vpack.c.b16 %v2405, %v2401
        %v2566 = vpack.c.b16 %v2410, %v2406
        %v2567 = vpack.c.b16 %v2411, %v2407
        %v2568 = vpack.c.b16 %v2412, %v2408
        %v2569 = vpack.c.b16 %v2413, %v2409
        %v2570 = vpack.c.b16 %v2418, %v2414
        %v2571 = vpack.c.b16 %v2419, %v2415
        %v2572 = vpack.c.b16 %v2420, %v2416
        %v2573 = vpack.c.b16 %v2421, %v2417
        %v2574 = vpack.c.b16 %v2426, %v2422
        %v2575 = vpack.c.b16 %v2427, %v2423
        %v2576 = vpack.c.b16 %v2428, %v2424
        %v2577 = vpack.c.b16 %v2429, %v2425
        %v2578 = vpack.c.b16 %v2434, %v2430
        %v2579 = vpack.c.b16 %v2435, %v2431
        %v2580 = vpack.c.b16 %v2436, %v2432
        %v2581 = vpack.c.b16 %v2437, %v2433
        %v2582 = vpack.c.b16 %v2442, %v2438
        %v2583 = vpack.c.b16 %v2443, %v2439
        %v2584 = vpack.c.b16 %v2444, %v2440
        %v2585 = vpack.c.b16 %v2445, %v2441
        %v2586 = vpack.c.b16 %v2450, %v2446
        %v2587 = vpack.c.b16 %v2451, %v2447
        %v2588 = vpack.c.b16 %v2452, %v2448
        %v2589 = vpack.c.b16 %v2453, %v2449
        %v2590 = vpack.c.b16 %v2458, %v2454
        %v2591 = vpack.c.b16 %v2459, %v2455
        %v2592 = vpack.c.b16 %v2460, %v2456
        %v2593 = vpack.c.b16 %v2461, %v2457
        %v2594 = vpack.c.b16 %v2466, %v2462
        %v2595 = vpack.c.b16 %v2467, %v2463
        %v2596 = vpack.c.b16 %v2468, %v2464
        %v2597 = vpack.c.b16 %v2469, %v2465
        %2726 = vmatprep.subr.bf16.mxu0 %v2499
        %2727 = vmatpush1.bf16.msra.mxu0 %v2498
        %2728 = vmatprep.subr.bf16.mxu0 %v2495
        %2729 = vmatpush1.bf16.msra.mxu0 %v2494
        %2730 = vmatprep.subr.bf16.mxu0 %v2491
        %2731 = vmatpush1.bf16.msra.mxu0 %v2490
        %2732 = vmatprep.subr.bf16.mxu0 %v2487
        %2733 = vmatpush1.bf16.msra.mxu0 %v2486
        %2734 = vmatprep.subr.bf16.mxu0 %v2483
        %2735 = vmatpush1.bf16.msra.mxu0 %v2482
        %2736 = vmatprep.subr.bf16.mxu0 %v2479
        %2737 = vmatpush1.bf16.msra.mxu0 %v2478
        %2738 = vmatprep.subr.bf16.mxu0 %v2475
        %2739 = vmatpush1.bf16.msra.mxu0 %v2474
        %2740 = vmatprep.subr.bf16.mxu0 %v2471
        %2741 = vmatpush1.bf16.msra.mxu0 %v2470
        %2742 = vmatprep.subr.bf16.mxu0 %v2531
        %2743 = vmatpush2.bf16.msra.mxu0 %v2530
        %2744 = vmatprep.subr.bf16.mxu0 %v2527
        %2745 = vmatpush2.bf16.msra.mxu0 %v2526
        %2746 = vmatprep.subr.bf16.mxu0 %v2523
        %2747 = vmatpush2.bf16.msra.mxu0 %v2522
        %2748 = vmatprep.subr.bf16.mxu0 %v2519
        %2749 = vmatpush2.bf16.msra.mxu0 %v2518
        %2750 = vmatprep.subr.bf16.mxu0 %v2515
        %2751 = vmatpush2.bf16.msra.mxu0 %v2514
        %2752 = vmatprep.subr.bf16.mxu0 %v2511
        %2753 = vmatpush2.bf16.msra.mxu0 %v2510
        %2754 = vmatprep.subr.bf16.mxu0 %v2507
        %2755 = vmatpush2.bf16.msra.mxu0 %v2506
        %2756 = vmatprep.subr.bf16.mxu0 %v2503
        %2757 = vmatpush2.bf16.msra.mxu0 %v2502
        %2758 = vmatprep.mubr.bf16.mxu0 %v1933
        %2759 = vmatmul.mubr.bf16.gmra.mxu0 %v1932
        %v2760 = vpop.f32.mrf.mxu0
        %v2761 = vadd.f32 %v2069, %v2760
        %v2762 = vpop.f32.mrf.mxu0
        %v2763 = vadd.f32 %v2073, %v2762
        %v2764 = vpop.f32.mrf.mxu0
        %v2765 = vadd.f32 %v2069, %v2764
        %v2766 = vpop.f32.mrf.mxu0
        %v2767 = vadd.f32 %v2073, %v2766
        %2768 = vdwg.mxu0
        %2769 = vmatprep.subr.bf16.mxu0 %v2563
        %2770 = vmatpush1.bf16.msra.mxu0 %v2562
        %2771 = vmatprep.subr.bf16.mxu0 %v2559
        %2772 = vmatpush1.bf16.msra.mxu0 %v2558
        %2773 = vmatprep.subr.bf16.mxu0 %v2555
        %2774 = vmatpush1.bf16.msra.mxu0 %v2554
        %2775 = vmatprep.subr.bf16.mxu0 %v2551
        %2776 = vmatpush1.bf16.msra.mxu0 %v2550
        %2777 = vmatprep.subr.bf16.mxu0 %v2547
        %2778 = vmatpush1.bf16.msra.mxu0 %v2546
        %2779 = vmatprep.subr.bf16.mxu0 %v2543
        %2780 = vmatpush1.bf16.msra.mxu0 %v2542
        %2781 = vmatprep.subr.bf16.mxu0 %v2539
        %2782 = vmatpush1.bf16.msra.mxu0 %v2538
        %2783 = vmatprep.subr.bf16.mxu0 %v2535
        %2784 = vmatpush1.bf16.msra.mxu0 %v2534
        %2785 = vmatprep.subr.bf16.mxu0 %v2595
        %2786 = vmatpush2.bf16.msra.mxu0 %v2594
        %2787 = vmatprep.subr.bf16.mxu0 %v2591
        %2788 = vmatpush2.bf16.msra.mxu0 %v2590
        %2789 = vmatprep.subr.bf16.mxu0 %v2587
        %2790 = vmatpush2.bf16.msra.mxu0 %v2586
        %2791 = vmatprep.subr.bf16.mxu0 %v2583
        %2792 = vmatpush2.bf16.msra.mxu0 %v2582
        %2793 = vmatprep.subr.bf16.mxu0 %v2579
        %2794 = vmatpush2.bf16.msra.mxu0 %v2578
        %2795 = vmatprep.subr.bf16.mxu0 %v2575
        %2796 = vmatpush2.bf16.msra.mxu0 %v2574
        %2797 = vmatprep.subr.bf16.mxu0 %v2571
        %2798 = vmatpush2.bf16.msra.mxu0 %v2570
        %2799 = vmatprep.subr.bf16.mxu0 %v2567
        %2800 = vmatpush2.bf16.msra.mxu0 %v2566
        %2801 = vmatprep.mubr.bf16.mxu0 %v1935
        %2802 = vmatmul.mubr.bf16.gmra.mxu0 %v1934
        %v2803 = vpop.f32.mrf.mxu0
        %v2804 = vadd.f32 %v2761, %v2803
        %v2805 = vpop.f32.mrf.mxu0
        %v2806 = vadd.f32 %v2763, %v2805
        %v2807 = vpop.f32.mrf.mxu0
        %v2808 = vadd.f32 %v2765, %v2807
        %v2809 = vpop.f32.mrf.mxu0
        %v2810 = vadd.f32 %v2767, %v2809
        %2811 = vdwg.mxu0
        %2812 = vmatprep.subr.bf16.mxu0 %v2501
        %2813 = vmatpush1.bf16.msra.mxu0 %v2500
        %2814 = vmatprep.subr.bf16.mxu0 %v2497
        %2815 = vmatpush1.bf16.msra.mxu0 %v2496
        %2816 = vmatprep.subr.bf16.mxu0 %v2493
        %2817 = vmatpush1.bf16.msra.mxu0 %v2492
        %2818 = vmatprep.subr.bf16.mxu0 %v2489
        %2819 = vmatpush1.bf16.msra.mxu0 %v2488
        %2820 = vmatprep.subr.bf16.mxu0 %v2485
        %2821 = vmatpush1.bf16.msra.mxu0 %v2484
        %2822 = vmatprep.subr.bf16.mxu0 %v2481
        %2823 = vmatpush1.bf16.msra.mxu0 %v2480
        %2824 = vmatprep.subr.bf16.mxu0 %v2477
        %2825 = vmatpush1.bf16.msra.mxu0 %v2476
        %2826 = vmatprep.subr.bf16.mxu0 %v2473
        %2827 = vmatpush1.bf16.msra.mxu0 %v2472
        %2828 = vmatprep.subr.bf16.mxu0 %v2533
        %2829 = vmatpush2.bf16.msra.mxu0 %v2532
        %2830 = vmatprep.subr.bf16.mxu0 %v2529
        %2831 = vmatpush2.bf16.msra.mxu0 %v2528
        %2832 = vmatprep.subr.bf16.mxu0 %v2525
        %2833 = vmatpush2.bf16.msra.mxu0 %v2524
        %2834 = vmatprep.subr.bf16.mxu0 %v2521
        %2835 = vmatpush2.bf16.msra.mxu0 %v2520
        %2836 = vmatprep.subr.bf16.mxu0 %v2517
        %2837 = vmatpush2.bf16.msra.mxu0 %v2516
        %2838 = vmatprep.subr.bf16.mxu0 %v2513
        %2839 = vmatpush2.bf16.msra.mxu0 %v2512
        %2840 = vmatprep.subr.bf16.mxu0 %v2509
        %2841 = vmatpush2.bf16.msra.mxu0 %v2508
        %2842 = vmatprep.subr.bf16.mxu0 %v2505
        %2843 = vmatpush2.bf16.msra.mxu0 %v2504
        %2844 = vmatprep.mubr.bf16.mxu0 %v1933
        %2845 = vmatmul.mubr.bf16.gmra.mxu0 %v1932
        %v2846 = vpop.f32.mrf.mxu0
        %v2847 = vadd.f32 %v2077, %v2846
        %v2848 = vpop.f32.mrf.mxu0
        %v2849 = vadd.f32 %v2081, %v2848
        %v2850 = vpop.f32.mrf.mxu0
        %v2851 = vadd.f32 %v2077, %v2850
        %v2852 = vpop.f32.mrf.mxu0
        %v2853 = vadd.f32 %v2081, %v2852
        %2854 = vdwg.mxu0
        %2855 = vmatprep.subr.bf16.mxu0 %v2565
        %2856 = vmatpush1.bf16.msra.mxu0 %v2564
        %2857 = vmatprep.subr.bf16.mxu0 %v2561
        %2858 = vmatpush1.bf16.msra.mxu0 %v2560
        %2859 = vmatprep.subr.bf16.mxu0 %v2557
        %2860 = vmatpush1.bf16.msra.mxu0 %v2556
        %2861 = vmatprep.subr.bf16.mxu0 %v2553
        %2862 = vmatpush1.bf16.msra.mxu0 %v2552
        %2863 = vmatprep.subr.bf16.mxu0 %v2549
        %2864 = vmatpush1.bf16.msra.mxu0 %v2548
        %2865 = vmatprep.subr.bf16.mxu0 %v2545
        %2866 = vmatpush1.bf16.msra.mxu0 %v2544
        %2867 = vmatprep.subr.bf16.mxu0 %v2541
        %2868 = vmatpush1.bf16.msra.mxu0 %v2540
        %2869 = vmatprep.subr.bf16.mxu0 %v2537
        %2870 = vmatpush1.bf16.msra.mxu0 %v2536
        %2871 = vmatprep.subr.bf16.mxu0 %v2597
        %2872 = vmatpush2.bf16.msra.mxu0 %v2596
        %2873 = vmatprep.subr.bf16.mxu0 %v2593
        %2874 = vmatpush2.bf16.msra.mxu0 %v2592
        %2875 = vmatprep.subr.bf16.mxu0 %v2589
        %2876 = vmatpush2.bf16.msra.mxu0 %v2588
        %2877 = vmatprep.subr.bf16.mxu0 %v2585
        %2878 = vmatpush2.bf16.msra.mxu0 %v2584
        %2879 = vmatprep.subr.bf16.mxu0 %v2581
        %2880 = vmatpush2.bf16.msra.mxu0 %v2580
        %2881 = vmatprep.subr.bf16.mxu0 %v2577
        %2882 = vmatpush2.bf16.msra.mxu0 %v2576
        %2883 = vmatprep.subr.bf16.mxu0 %v2573
        %2884 = vmatpush2.bf16.msra.mxu0 %v2572
        %2885 = vmatprep.subr.bf16.mxu0 %v2569
        %2886 = vmatpush2.bf16.msra.mxu0 %v2568
        %2887 = vmatprep.mubr.bf16.mxu0 %v1935
        %2888 = vmatmul.mubr.bf16.gmra.mxu0 %v1934
        %v2889 = vpop.f32.mrf.mxu0
        %v2890 = vadd.f32 %v2847, %v2889
        %v2891 = vpop.f32.mrf.mxu0
        %v2892 = vadd.f32 %v2849, %v2891
        %v2893 = vpop.f32.mrf.mxu0
        %v2894 = vadd.f32 %v2851, %v2893
        %v2895 = vpop.f32.mrf.mxu0
        %v2896 = vadd.f32 %v2853, %v2895
        %2897 = vdwg.mxu0
        %v2898 = vmax.f32 %v2804, 0.0
        %v2899 = vmax.f32 %v2806, 0.0
        %v2900 = vmax.f32 %v2890, 0.0
        %v2901 = vmax.f32 %v2892, 0.0
        %v2902 = vmax.f32 %v2808, 0.0
        %v2903 = vmax.f32 %v2810, 0.0
        %v2904 = vmax.f32 %v2894, 0.0
        %v2905 = vmax.f32 %v2896, 0.0
        %v2906 = vpack.c.bf16 %v2902, %v2898
        %v2907 = vpack.c.bf16 %v2903, %v2899
        %v2908 = vpack.c.bf16 %v2904, %v2900
        %v2909 = vpack.c.bf16 %v2905, %v2901
        %v2910 = vld [vmem:[#allocation10] sm:$0xf]
        %v2911 = vld [vmem:[#allocation10 + $0x4] sm:$0xf]
        %v2912 = vld [vmem:[#allocation10 + $0x8] sm:$0xf]
        %v2913 = vld [vmem:[#allocation10 + $0xc] sm:$0xf]
        %v2914 = vld [vmem:[#allocation10 + $0x10] sm:$0xf]
        %v2915 = vld [vmem:[#allocation10 + $0x14] sm:$0xf]
        %v2916 = vld [vmem:[#allocation10 + $0x18] sm:$0xf]
        %v2917 = vld [vmem:[#allocation10 + $0x1c] sm:$0xf]
        %v2918 = vld [vmem:[#allocation10 + $0x20] sm:$0xf]
        %v2919 = vld [vmem:[#allocation10 + $0x24] sm:$0xf]
        %v2920 = vld [vmem:[#allocation10 + $0x28] sm:$0xf]
        %v2921 = vld [vmem:[#allocation10 + $0x2c] sm:$0xf]
        %v2922 = vld [vmem:[#allocation10 + $0x30] sm:$0xf]
        %v2923 = vld [vmem:[#allocation10 + $0x34] sm:$0xf]
        %v2924 = vld [vmem:[#allocation10 + $0x38] sm:$0xf]
        %v2925 = vld [vmem:[#allocation10 + $0x3c] sm:$0xf]
        %v2926 = vld [vmem:[#allocation10 + $0x40] sm:$0xf]
        %v2927 = vld [vmem:[#allocation10 + $0x44] sm:$0xf]
        %v2928 = vld [vmem:[#allocation10 + $0x48] sm:$0xf]
        %v2929 = vld [vmem:[#allocation10 + $0x4c] sm:$0xf]
        %v2930 = vld [vmem:[#allocation10 + $0x50] sm:$0xf]
        %v2931 = vld [vmem:[#allocation10 + $0x54] sm:$0xf]
        %v2932 = vld [vmem:[#allocation10 + $0x58] sm:$0xf]
        %v2933 = vld [vmem:[#allocation10 + $0x5c] sm:$0xf]
        %v2934 = vld [vmem:[#allocation10 + $0x60] sm:$0xf]
        %v2935 = vld [vmem:[#allocation10 + $0x64] sm:$0xf]
        %v2936 = vld [vmem:[#allocation10 + $0x68] sm:$0xf]
        %v2937 = vld [vmem:[#allocation10 + $0x6c] sm:$0xf]
        %v2938 = vld [vmem:[#allocation10 + $0x70] sm:$0xf]
        %v2939 = vld [vmem:[#allocation10 + $0x74] sm:$0xf]
        %v2940 = vld [vmem:[#allocation10 + $0x78] sm:$0xf]
        %v2941 = vld [vmem:[#allocation10 + $0x7c] sm:$0xf]
        %v2942 = vld [vmem:[#allocation10 + $0x80] sm:$0xf]
        %v2943 = vld [vmem:[#allocation10 + $0x84] sm:$0xf]
        %v2944 = vld [vmem:[#allocation10 + $0x88] sm:$0xf]
        %v2945 = vld [vmem:[#allocation10 + $0x8c] sm:$0xf]
        %v2946 = vld [vmem:[#allocation10 + $0x90] sm:$0xf]
        %v2947 = vld [vmem:[#allocation10 + $0x94] sm:$0xf]
        %v2948 = vld [vmem:[#allocation10 + $0x98] sm:$0xf]
        %v2949 = vld [vmem:[#allocation10 + $0x9c] sm:$0xf]
        %v2950 = vld [vmem:[#allocation10 + $0xa0] sm:$0xf]
        %v2951 = vld [vmem:[#allocation10 + $0xa4] sm:$0xf]
        %v2952 = vld [vmem:[#allocation10 + $0xa8] sm:$0xf]
        %v2953 = vld [vmem:[#allocation10 + $0xac] sm:$0xf]
        %v2954 = vld [vmem:[#allocation10 + $0xb0] sm:$0xf]
        %v2955 = vld [vmem:[#allocation10 + $0xb4] sm:$0xf]
        %v2956 = vld [vmem:[#allocation10 + $0xb8] sm:$0xf]
        %v2957 = vld [vmem:[#allocation10 + $0xbc] sm:$0xf]
        %v2958 = vld [vmem:[#allocation10 + $0xc0] sm:$0xf]
        %v2959 = vld [vmem:[#allocation10 + $0xc4] sm:$0xf]
        %v2960 = vld [vmem:[#allocation10 + $0xc8] sm:$0xf]
        %v2961 = vld [vmem:[#allocation10 + $0xcc] sm:$0xf]
        %v2962 = vld [vmem:[#allocation10 + $0xd0] sm:$0xf]
        %v2963 = vld [vmem:[#allocation10 + $0xd4] sm:$0xf]
        %v2964 = vld [vmem:[#allocation10 + $0xd8] sm:$0xf]
        %v2965 = vld [vmem:[#allocation10 + $0xdc] sm:$0xf]
        %v2966 = vld [vmem:[#allocation10 + $0xe0] sm:$0xf]
        %v2967 = vld [vmem:[#allocation10 + $0xe4] sm:$0xf]
        %v2968 = vld [vmem:[#allocation10 + $0xe8] sm:$0xf]
        %v2969 = vld [vmem:[#allocation10 + $0xec] sm:$0xf]
        %v2970 = vld [vmem:[#allocation10 + $0xf0] sm:$0xf]
        %v2971 = vld [vmem:[#allocation10 + $0xf4] sm:$0xf]
        %v2972 = vld [vmem:[#allocation10 + $0xf8] sm:$0xf]
        %v2973 = vld [vmem:[#allocation10 + $0xfc] sm:$0xf]
        %v2974 = vld [vmem:[%s6] sm:$0x1]
        %v2976 = vlaneseq
        %v2977 = vshrl.u32 %v2976, 7
        %v2978 = vsub.s32 0, %v2977
        %v2979 = vrot.slane %v2974, %v2978
        %v3045 = vunpack.c.l.b16 %v2910
        %v3046 = vunpack.c.l.b16 %v2911
        %v3047 = vunpack.c.l.b16 %v2912
        %v3048 = vunpack.c.l.b16 %v2913
        %v3049 = vunpack.c.l.b16 %v2914
        %v3050 = vunpack.c.l.b16 %v2915
        %v3051 = vunpack.c.l.b16 %v2916
        %v3052 = vunpack.c.l.b16 %v2917
        %v3053 = vunpack.c.l.b16 %v2918
        %v3054 = vunpack.c.l.b16 %v2919
        %v3055 = vunpack.c.l.b16 %v2920
        %v3056 = vunpack.c.l.b16 %v2921
        %v3057 = vunpack.c.l.b16 %v2922
        %v3058 = vunpack.c.l.b16 %v2923
        %v3059 = vunpack.c.l.b16 %v2924
        %v3060 = vunpack.c.l.b16 %v2925
        %v3061 = vunpack.c.l.b16 %v2926
        %v3062 = vunpack.c.l.b16 %v2927
        %v3063 = vunpack.c.l.b16 %v2928
        %v3064 = vunpack.c.l.b16 %v2929
        %v3065 = vunpack.c.l.b16 %v2930
        %v3066 = vunpack.c.l.b16 %v2931
        %v3067 = vunpack.c.l.b16 %v2932
        %v3068 = vunpack.c.l.b16 %v2933
        %v3069 = vunpack.c.l.b16 %v2934
        %v3070 = vunpack.c.l.b16 %v2935
        %v3071 = vunpack.c.l.b16 %v2936
        %v3072 = vunpack.c.l.b16 %v2937
        %v3073 = vunpack.c.l.b16 %v2938
        %v3074 = vunpack.c.l.b16 %v2939
        %v3075 = vunpack.c.l.b16 %v2940
        %v3076 = vunpack.c.l.b16 %v2941
        %v3077 = vunpack.c.l.b16 %v2942
        %v3078 = vunpack.c.l.b16 %v2943
        %v3079 = vunpack.c.l.b16 %v2944
        %v3080 = vunpack.c.l.b16 %v2945
        %v3081 = vunpack.c.l.b16 %v2946
        %v3082 = vunpack.c.l.b16 %v2947
        %v3083 = vunpack.c.l.b16 %v2948
        %v3084 = vunpack.c.l.b16 %v2949
        %v3085 = vunpack.c.l.b16 %v2950
        %v3086 = vunpack.c.l.b16 %v2951
        %v3087 = vunpack.c.l.b16 %v2952
        %v3088 = vunpack.c.l.b16 %v2953
        %v3089 = vunpack.c.l.b16 %v2954
        %v3090 = vunpack.c.l.b16 %v2955
        %v3091 = vunpack.c.l.b16 %v2956
        %v3092 = vunpack.c.l.b16 %v2957
        %v3093 = vunpack.c.l.b16 %v2958
        %v3094 = vunpack.c.l.b16 %v2959
        %v3095 = vunpack.c.l.b16 %v2960
        %v3096 = vunpack.c.l.b16 %v2961
        %v3097 = vunpack.c.l.b16 %v2962
        %v3098 = vunpack.c.l.b16 %v2963
        %v3099 = vunpack.c.l.b16 %v2964
        %v3100 = vunpack.c.l.b16 %v2965
        %v3101 = vunpack.c.l.b16 %v2966
        %v3102 = vunpack.c.l.b16 %v2967
        %v3103 = vunpack.c.l.b16 %v2968
        %v3104 = vunpack.c.l.b16 %v2969
        %v3105 = vunpack.c.l.b16 %v2970
        %v3106 = vunpack.c.l.b16 %v2971
        %v3107 = vunpack.c.l.b16 %v2972
        %v3108 = vunpack.c.l.b16 %v2973
        %v3109 = vpack.c.b16 %v3046, %v3045
        %v3110 = vpack.c.b16 %v3048, %v3047
        %v3111 = vpack.c.b16 %v3050, %v3049
        %v3112 = vpack.c.b16 %v3052, %v3051
        %v3113 = vpack.c.b16 %v3054, %v3053
        %v3114 = vpack.c.b16 %v3056, %v3055
        %v3115 = vpack.c.b16 %v3058, %v3057
        %v3116 = vpack.c.b16 %v3060, %v3059
        %v3117 = vpack.c.b16 %v3062, %v3061
        %v3118 = vpack.c.b16 %v3064, %v3063
        %v3119 = vpack.c.b16 %v3066, %v3065
        %v3120 = vpack.c.b16 %v3068, %v3067
        %v3121 = vpack.c.b16 %v3070, %v3069
        %v3122 = vpack.c.b16 %v3072, %v3071
        %v3123 = vpack.c.b16 %v3074, %v3073
        %v3124 = vpack.c.b16 %v3076, %v3075
        %v3125 = vpack.c.b16 %v3078, %v3077
        %v3126 = vpack.c.b16 %v3080, %v3079
        %v3127 = vpack.c.b16 %v3082, %v3081
        %v3128 = vpack.c.b16 %v3084, %v3083
        %v3129 = vpack.c.b16 %v3086, %v3085
        %v3130 = vpack.c.b16 %v3088, %v3087
        %v3131 = vpack.c.b16 %v3090, %v3089
        %v3132 = vpack.c.b16 %v3092, %v3091
        %v3133 = vpack.c.b16 %v3094, %v3093
        %v3134 = vpack.c.b16 %v3096, %v3095
        %v3135 = vpack.c.b16 %v3098, %v3097
        %v3136 = vpack.c.b16 %v3100, %v3099
        %v3137 = vpack.c.b16 %v3102, %v3101
        %v3138 = vpack.c.b16 %v3104, %v3103
        %v3139 = vpack.c.b16 %v3106, %v3105
        %v3140 = vpack.c.b16 %v3108, %v3107
        %3173 = vmatprep.subr.bf16.mxu0 0
        %3174 = vmatpush1.bf16.msra.mxu0 %v3116
        %3175 = vmatprep.subr.bf16.mxu0 0
        %3176 = vmatpush1.bf16.msra.mxu0 %v3115
        %3177 = vmatprep.subr.bf16.mxu0 0
        %3178 = vmatpush1.bf16.msra.mxu0 %v3114
        %3179 = vmatprep.subr.bf16.mxu0 0
        %3180 = vmatpush1.bf16.msra.mxu0 %v3113
        %3181 = vmatprep.subr.bf16.mxu0 0
        %3182 = vmatpush1.bf16.msra.mxu0 %v3112
        %3183 = vmatprep.subr.bf16.mxu0 0
        %3184 = vmatpush1.bf16.msra.mxu0 %v3111
        %3185 = vmatprep.subr.bf16.mxu0 0
        %3186 = vmatpush1.bf16.msra.mxu0 %v3110
        %3187 = vmatprep.subr.bf16.mxu0 0
        %3188 = vmatpush1.bf16.msra.mxu0 %v3109
        %3189 = vmatprep.subr.bf16.mxu0 0
        %3190 = vmatpush2.bf16.msra.mxu0 %v3124
        %3191 = vmatprep.subr.bf16.mxu0 0
        %3192 = vmatpush2.bf16.msra.mxu0 %v3123
        %3193 = vmatprep.subr.bf16.mxu0 0
        %3194 = vmatpush2.bf16.msra.mxu0 %v3122
        %3195 = vmatprep.subr.bf16.mxu0 0
        %3196 = vmatpush2.bf16.msra.mxu0 %v3121
        %3197 = vmatprep.subr.bf16.mxu0 0
        %3198 = vmatpush2.bf16.msra.mxu0 %v3120
        %3199 = vmatprep.subr.bf16.mxu0 0
        %3200 = vmatpush2.bf16.msra.mxu0 %v3119
        %3201 = vmatprep.subr.bf16.mxu0 0
        %3202 = vmatpush2.bf16.msra.mxu0 %v3118
        %3203 = vmatprep.subr.bf16.mxu0 0
        %3204 = vmatpush2.bf16.msra.mxu0 %v3117
        %3205 = vmatprep.mubr.bf16.mxu0 %v2907
        %3206 = vmatmul.mubr.bf16.gmra.mxu0 %v2906
        %v3207 = vpop.f32.mrf.mxu0
        %v3208 = vadd.f32 %v2979, %v3207
        %v3209 = vpop.f32.mrf.mxu0
        %v3210 = vpop.f32.mrf.mxu0
        %v3211 = vadd.f32 %v2979, %v3210
        %v3212 = vpop.f32.mrf.mxu0
        %3213 = vdwg.mxu0
        %3214 = vmatprep.subr.bf16.mxu0 0
        %3215 = vmatpush1.bf16.msra.mxu0 %v3132
        %3216 = vmatprep.subr.bf16.mxu0 0
        %3217 = vmatpush1.bf16.msra.mxu0 %v3131
        %3218 = vmatprep.subr.bf16.mxu0 0
        %3219 = vmatpush1.bf16.msra.mxu0 %v3130
        %3220 = vmatprep.subr.bf16.mxu0 0
        %3221 = vmatpush1.bf16.msra.mxu0 %v3129
        %3222 = vmatprep.subr.bf16.mxu0 0
        %3223 = vmatpush1.bf16.msra.mxu0 %v3128
        %3224 = vmatprep.subr.bf16.mxu0 0
        %3225 = vmatpush1.bf16.msra.mxu0 %v3127
        %3226 = vmatprep.subr.bf16.mxu0 0
        %3227 = vmatpush1.bf16.msra.mxu0 %v3126
        %3228 = vmatprep.subr.bf16.mxu0 0
        %3229 = vmatpush1.bf16.msra.mxu0 %v3125
        %3230 = vmatprep.subr.bf16.mxu0 0
        %3231 = vmatpush2.bf16.msra.mxu0 %v3140
        %3232 = vmatprep.subr.bf16.mxu0 0
        %3233 = vmatpush2.bf16.msra.mxu0 %v3139
        %3234 = vmatprep.subr.bf16.mxu0 0
        %3235 = vmatpush2.bf16.msra.mxu0 %v3138
        %3236 = vmatprep.subr.bf16.mxu0 0
        %3237 = vmatpush2.bf16.msra.mxu0 %v3137
        %3238 = vmatprep.subr.bf16.mxu0 0
        %3239 = vmatpush2.bf16.msra.mxu0 %v3136
        %3240 = vmatprep.subr.bf16.mxu0 0
        %3241 = vmatpush2.bf16.msra.mxu0 %v3135
        %3242 = vmatprep.subr.bf16.mxu0 0
        %3243 = vmatpush2.bf16.msra.mxu0 %v3134
        %3244 = vmatprep.subr.bf16.mxu0 0
        %3245 = vmatpush2.bf16.msra.mxu0 %v3133
        %3246 = vmatprep.mubr.bf16.mxu0 %v2909
        %3247 = vmatmul.mubr.bf16.gmra.mxu0 %v2908
        %v3248 = vpop.f32.mrf.mxu0
        %v3249 = vadd.f32 %v3208, %v3248
        %v3250 = vpop.f32.mrf.mxu0
        %v3251 = vpop.f32.mrf.mxu0
        %v3252 = vadd.f32 %v3211, %v3251
        %v3253 = vpop.f32.mrf.mxu0
        %3254 = vdwg.mxu0
        %3255 = vst [vmem:[%s353] sm:$0xff] %v3249
        %3256 = vst [vmem:[%s353 + $0x8] sm:$0xff] %v3252
        %s3257 = sand.u32 %s186, 1
        %s3258 = scalar_lea.sflag [#allocation4], %s3257
        %s3259 = sand.u32 %s186, 1
        %s3260 = smul.addr %s3259, 16
        %s3261 = scalar_lea.vmem [#allocation11], %s3260
        // Predicated region
        $region69: #{tpu_custom_call.1} parent=47 // pred_check
          %p3262 = pneg %p196
        $region70: #{tpu_custom_call.1} parent=47 // pred_check_branch
          %3264 = sbr.rel (%p3262) target = $region72
        $region71: #{tpu_custom_call.1} parent=47 // pred_region
          %s3265 = smul.u32 2, %s26
          %s3267 = ssub.s32 256, 256
          %3268 = vsyncadd %s3258, %s3267
          %s3269 = smul.addr %s3265, 128
          %s3270 = scalar_lea.hbm %s7, %s3269
          %s3271 = sshll.u32 %s3261, 4
          %s3272 = int_to_ptr.vmem [resolvable:$true] %s3271
          %3277 = dma.vmem_to_hbm [thread:$0]  %s3272, 256, %s3270, %s3258, 128, 128, 8
        $region72: #{tpu_custom_call.1} parent=47 // pred_fallthru
          _
      $region48: #{tpu_custom_call.1} parent=5 // pred_fallthru
        _
      %p3278 = scmp.le.s32.totalorder 2, %s21
      // Predicated region
      $region73: #{tpu_custom_call.1} parent=5 // pred_check
        %p3279 = pneg %p3278
      $region74: #{tpu_custom_call.1} parent=5 // pred_check_branch
        %3281 = sbr.rel (%p3279) target = $region76
      $region75: #{tpu_custom_call.1} parent=5 // pred_region
        %s3282 = ssub.s32 %s21, 2
        // Predicated region
        $region77: #{tpu_custom_call.1} parent=75 // pred_check
          %p3283 = pneg %p202
        $region78: #{tpu_custom_call.1} parent=75 // pred_check_branch
          %3285 = sbr.rel (%p3283) target = $region80
        $region79: #{tpu_custom_call.1} parent=75 // pred_region
          %s3286 = sand.u32 %s187, 1
          %s3287 = scalar_lea.sflag [#allocation4], %s3286
          %s3288 = sand.u32 %s187, 1
          %s3289 = smul.addr %s3288, 16
          %s3290 = scalar_lea.vmem [#allocation11], %s3289
          %3291 = dma.done %s3287, 256
        $region80: #{tpu_custom_call.1} parent=75 // pred_fallthru
          _
      $region76: #{tpu_custom_call.1} parent=5 // pred_fallthru
        _
    $region6: #{tpu_custom_call.1} parent=1 // loop_footer
      %s25 = sadd.s32 1, %s21
    $region7: #{tpu_custom_call.1} parent=1 // loop_footer_branch
      %20 = sbr.rel target = $region3
    $region8: #{tpu_custom_call.1} parent=1 // loop_exit
      _
    %3292 = vsyncpa [#allocation3], 1
    %s3293 = scalar_lea.sflag [#allocation3], 1
    %3294 = vsyncpa %s3293, 1
    %3295 = vsyncpa [#allocation6], 1
    %3296 = vsyncpa [#allocation9], 1
    %3297 = vsyncpa [#allocation4], 1
    %s3298 = scalar_lea.sflag [#allocation4], 1
    %3299 = vsyncpa %s3298, 1

</llo_original>
